<compile_context>
chip_gen: v6e
topology: v6e:2x2x1
jax: 0.10.0
libtpu: 0.0.40
codegen_flags: <defaults>
</compile_context>

<pallas_src>
import numpy as np
import jax
import jax.numpy as jnp
from jax.experimental import pallas as pl
from jax.experimental.pallas import tpu as pltpu

EPS = 1e-5


def _elementwise_bf16_ok():
    # bf16 VALU exists on v6e/v7x; v5e (and older/unknown) keep elementwise f32.
    try:
        kind = jax.devices()[0].device_kind.lower()
    except Exception:
        return False
    return ("v6" in kind) or ("v7" in kind)


def _vmem_limit_bytes(NHW, Cin, Cmid, Cout, mask_bytes):
    per_col = (4 * Cin                 # x slab (f32)
               + 4 * Cout              # out slab (f32)
               + 2 * 9 * Cmid          # bf16 tap scratch
               + 2 * 9 * mask_bytes    # masks input (double-buffered block)
               + 4 * 4 * Cmid)         # f32 intermediates (h, acc, h2, h3)
    est = NHW * per_col + (2 << 20)    # weights / BN params / pipeline overhead
    return int(min(max(2 * est, 32 << 20), 64 << 20))


def make_invres_kernel(N, H, W, Cin, Cmid, Cout, elementwise_bf16):
    HW = H * W
    NHW = N * HW
    inv_n = 1.0 / NHW

    def bn(v, gamma, beta):
        # Training-mode BatchNorm2d (biased variance), one-pass stats, folded to
        # a single per-channel scale/shift.  All f32.
        mean = jnp.sum(v, axis=1, keepdims=True) * inv_n
        var = jnp.sum(v * v, axis=1, keepdims=True) * inv_n - mean * mean
        scale = gamma * jax.lax.rsqrt(var + EPS)          # (C, 1)
        shift = beta - mean * scale                       # (C, 1)
        return v * scale + shift

    def kernel(x_hbm, masks_ref,
               w1_ref, g1_ref, be1_ref,
               w2_ref, g2_ref, be2_ref,
               w3_ref, g3_ref, be3_ref,
               o_hbm,
               x_slab, o_slab, taps_ref, in_sems, out_sems):
        # ---- NCHW -> (C, N*H*W) relayout folded into the kernel's DMA:
        #      slab[:, n*HW:(n+1)*HW] == x[n].reshape(C, HW), N small copies. ----
        in_copies = []
        for n in range(N):
            cp = pltpu.make_async_copy(
                x_hbm.at[n], x_slab.at[:, pl.ds(n * HW, HW)], in_sems.at[n])
            cp.start()
            in_copies.append(cp)
        for cp in in_copies:
            cp.wait()

        x = x_slab[...]                                   # (Cin, NHW) f32
        masks = masks_ref[...]                            # (9, NHW)

        # --- conv1: 1x1 conv == channel matmul (bf16 MXU, f32 acc), BN, ReLU ---
        h = jnp.dot(w1_ref[...], x.astype(jnp.bfloat16),
                    preferred_element_type=jnp.float32)   # (Cmid, NHW) f32
        h = jnp.maximum(bn(h, g1_ref[...], be1_ref[...]), 0.0)

        # --- conv2: 3x3 / pad=1 conv.  9 shifted+masked taps written straight
        #     into a (9*Cmid, NHW) bf16 VMEM scratch (each tap is tile-aligned
        #     on the sublane axis), then ONE wide-contraction MXU matmul. ---
        if elementwise_bf16:
            h_src = h.astype(jnp.bfloat16)   # cast once; rolls & masks in bf16
        else:
            h_src = h                        # v5e: keep VPU elementwise in f32
        for k in range(9):
            oy, ox = k // 3 - 1, k % 3 - 1
            d = oy * W + ox                  # flattened neighbor offset
            shifted = h_src if d == 0 else pltpu.roll(h_src, (-d) % NHW, axis=1)
            if oy == 0 and ox == 0:
                tap = shifted                # center mask is all-ones
            else:
                # zero implicit padding and every roll wrap-around / batch-
                # boundary crossing (mask is (1, NHW), sublane-broadcast).
                tap = shifted * masks[k:k + 1, :]
            taps_ref[pl.ds(k * Cmid, Cmid), :] = tap.astype(jnp.bfloat16)
        acc = jnp.dot(w2_ref[...], taps_ref[...],
                      preferred_element_type=jnp.float32)  # (Cmid, NHW) f32
        h2 = jnp.maximum(bn(acc, g2_ref[...], be2_ref[...]), 0.0)

        # --- conv3: 1x1 conv + BN, residual add (Cin == Cout), final ReLU ---
        h3 = jnp.dot(w3_ref[...], h2.astype(jnp.bfloat16),
                     preferred_element_type=jnp.float32)   # (Cout, NHW) f32
        h3 = bn(h3, g3_ref[...], be3_ref[...])
        o_slab[...] = jnp.maximum(h3 + x, 0.0)

        # ---- (C, N*H*W) -> NCHW relayout on the way out, again via DMA. ----
        out_copies = []
        for n in range(N):
            cp = pltpu.make_async_copy(
                o_slab.at[:, pl.ds(n * HW, HW)], o_hbm.at[n], out_sems.at[n])
            cp.start()
            out_copies.append(cp)
        for cp in out_copies:
            cp.wait()

    return kernel


def invres_block_forward(x_nchw, params):
    N, Cin, H, W = x_nchw.shape
    Cmid = params["w1"].shape[0]
    Cout = params["w3"].shape[0]
    assert Cin == Cout, "residual add requires in_channels == out_channels"
    HW = H * W
    NHW = N * HW

    elementwise_bf16 = _elementwise_bf16_ok()
    mask_dtype = jnp.bfloat16 if elementwise_bf16 else jnp.float32
    mask_bytes = 2 if elementwise_bf16 else 4

    def col(v):  # (C,) -> (C, 1) so it broadcasts along lanes inside the kernel
        return v.reshape(-1, 1).astype(jnp.float32)

    # Matmul operands in bf16 (f32 accumulation on the MXU).  Conv biases are
    # intentionally NOT passed: training-mode BN's mean subtraction cancels them.
    w1 = params["w1"][:, :, 0, 0].astype(jnp.bfloat16)                  # (Cmid, Cin)
    # (O, I, ky, kx) -> (O, ky, kx, I) -> (O, 9*I); column block k = ky*3+kx
    w2s = jnp.transpose(params["w2"], (0, 2, 3, 1)).reshape(Cmid, 9 * Cmid)
    w2s = w2s.astype(jnp.bfloat16)                                      # (Cmid, 9*Cmid)
    w3 = params["w3"][:, :, 0, 0].astype(jnp.bfloat16)                  # (Cout, Cmid)

    # Host-precomputed tap-validity masks: 1.0 where the 3x3 neighbor lies inside
    # the same image, 0.0 for implicit padding / wrap-around / batch crossings.
    # Exact 0/1 values -> safe in bf16.
    p = np.arange(NHW)
    cc = p % W
    rr = (p // W) % H
    masks_np = np.zeros((9, NHW), np.float32)
    for k in range(9):
        oy, ox = k // 3 - 1, k % 3 - 1
        masks_np[k] = (((cc + ox) >= 0) & ((cc + ox) < W) &
                       ((rr + oy) >= 0) & ((rr + oy) < H)).astype(np.float32)
    masks = jnp.asarray(masks_np, dtype=mask_dtype)

    # NCHW -> (N, C, H*W) is a free, layout-preserving view; the real relayout
    # to (C, N*H*W) happens inside the kernel via N DMA copies (no extra HBM pass).
    x3 = x_nchw.astype(jnp.float32).reshape(N, Cin, HW)

    vmem_args = (masks,
                 w1, col(params["g1"]), col(params["be1"]),
                 w2s, col(params["g2"]), col(params["be2"]),
                 w3, col(params["g3"]), col(params["be3"]))

    def full_spec(a):
        nd = a.ndim
        return pl.BlockSpec(a.shape, lambda i, _nd=nd: (0,) * _nd)

    # Single program: batch-statistics BN needs the whole (C, NHW) slab resident.
    # TODO(synk): tile the lane axis (halo'd 3x3 tiles + two-pass BN) and mark it
    # "parallel" for v7x megacore once NHW grows past the VMEM budget.
    out3 = pl.pallas_call(
        make_invres_kernel(N, H, W, Cin, Cmid, Cout, elementwise_bf16),
        out_shape=jax.ShapeDtypeStruct((N, Cout, HW), jnp.float32),
        grid_spec=pltpu.PrefetchScalarGridSpec(
            num_scalar_prefetch=0,
            grid=(1,),
            in_specs=[pl.BlockSpec(memory_space=pl.ANY)]
                     + [full_spec(a) for a in vmem_args],
            out_specs=pl.BlockSpec(memory_space=pl.ANY),
            scratch_shapes=[
                pltpu.VMEM((Cin, NHW), jnp.float32),        # x slab
                pltpu.VMEM((Cout, NHW), jnp.float32),       # out slab
                pltpu.VMEM((9 * Cmid, NHW), jnp.bfloat16),  # stacked conv2 taps
                pltpu.SemaphoreType.DMA((N,)),              # input copies
                pltpu.SemaphoreType.DMA((N,)),              # output copies
            ]),
        compiler_params=pltpu.CompilerParams(
            dimension_semantics=("arbitrary",),
            vmem_limit_bytes=_vmem_limit_bytes(NHW, Cin, Cmid, Cout, mask_bytes)),
    )(x3, *vmem_args)

    # (N, Cout, H*W) -> NCHW is again a free view reshape.
    return out3.reshape(N, Cout, H, W)


# ----------------------------- reference (plain JAX) -----------------------------
def reference_forward(x, p):
    def conv(v, w, b, pad):
        out = jax.lax.conv_general_dilated(
            v, w, window_strides=(1, 1), padding=[(pad, pad), (pad, pad)],
            dimension_numbers=("NCHW", "OIHW", "NCHW"),
            precision=jax.lax.Precision.HIGHEST)
        return out + b[None, :, None, None]

    def bn(v, g, b):
        mean = jnp.mean(v, axis=(0, 2, 3), keepdims=True)
        var = jnp.mean(jnp.square(v - mean), axis=(0, 2, 3), keepdims=True)
        return ((v - mean) * jax.lax.rsqrt(var + EPS) * g[None, :, None, None]
                + b[None, :, None, None])

    h = jax.nn.relu(bn(conv(x, p["w1"], p["b1"], 0), p["g1"], p["be1"]))
    h = jax.nn.relu(bn(conv(h, p["w2"], p["b2"], 1), p["g2"], p["be2"]))
    h = bn(conv(h, p["w3"], p["b3"], 0), p["g3"], p["be3"])
    return jax.nn.relu(h + x)


def init_params(key, Cin, Cmid, Cout):
    ks = jax.random.split(key, 12)

    def w(k, shape, fan_in):
        return jax.random.normal(k, shape, jnp.float32) / np.sqrt(fan_in)

    p = {}
    p["w1"] = w(ks[0], (Cmid, Cin, 1, 1), Cin)
    p["b1"] = 0.1 * jax.random.normal(ks[1], (Cmid,), jnp.float32)
    p["g1"] = 1.0 + 0.1 * jax.random.normal(ks[2], (Cmid,), jnp.float32)
    p["be1"] = 0.1 * jax.random.normal(ks[3], (Cmid,), jnp.float32)
    p["w2"] = w(ks[4], (Cmid, Cmid, 3, 3), Cmid * 9)
    p["b2"] = 0.1 * jax.random.normal(ks[5], (Cmid,), jnp.float32)
    p["g2"] = 1.0 + 0.1 * jax.random.normal(ks[6], (Cmid,), jnp.float32)
    p["be2"] = 0.1 * jax.random.normal(ks[7], (Cmid,), jnp.float32)
    p["w3"] = w(ks[8], (Cout, Cmid, 1, 1), Cmid)
    p["b3"] = 0.1 * jax.random.normal(ks[9], (Cout,), jnp.float32)
    p["g3"] = 1.0 + 0.1 * jax.random.normal(ks[10], (Cout,), jnp.float32)
    p["be3"] = 0.1 * jax.random.normal(ks[11], (Cout,), jnp.float32)
    return p


if __name__ == "__main__":
    key = jax.random.PRNGKey(0)
    kx, kp = jax.random.split(key)
    N, Cin, Cmid, Cout, H, W = 2, 8, 16, 8, 16, 16
    x = jax.random.normal(kx, (N, Cin, H, W), jnp.float32)
    params = init_params(kp, Cin, Cmid, Cout)

    out = jax.block_until_ready(invres_block_forward(x, params))
    ref = jax.block_until_ready(reference_forward(x, params))

    np.testing.assert_allclose(np.asarray(out), np.asarray(ref), rtol=2e-2, atol=2e-2)
    # TODO(synk): BatchNorm running_mean/running_var buffer updates (a training
    # side effect that does not change the forward output) are not reproduced.
    print("KERNEL_OK")
</pallas_src>

<mosaic_0001>
module attributes {stable_mosaic.version = 11 : i64} {
  func.func @kernel(%arg0: i32, %arg1: memref<2x8x256xf32, #tpu.memory_space<any>>, %arg2: memref<9x512xf32, #tpu.memory_space<vmem>>, %arg3: memref<16x8xbf16, #tpu.memory_space<vmem>>, %arg4: memref<16x1xf32, #tpu.memory_space<vmem>>, %arg5: memref<16x1xf32, #tpu.memory_space<vmem>>, %arg6: memref<16x144xbf16, #tpu.memory_space<vmem>>, %arg7: memref<16x1xf32, #tpu.memory_space<vmem>>, %arg8: memref<16x1xf32, #tpu.memory_space<vmem>>, %arg9: memref<8x16xbf16, #tpu.memory_space<vmem>>, %arg10: memref<8x1xf32, #tpu.memory_space<vmem>>, %arg11: memref<8x1xf32, #tpu.memory_space<vmem>>, %arg12: memref<2x8x256xf32, #tpu.memory_space<any>>, %arg13: memref<8x512xf32, #tpu.memory_space<vmem>>, %arg14: memref<8x512xf32, #tpu.memory_space<vmem>>, %arg15: memref<144x512xbf16, #tpu.memory_space<vmem>>, %arg16: memref<2x!tpu.dma_semaphore, #tpu.memory_space<semaphore_mem>>, %arg17: memref<2x!tpu.dma_semaphore, #tpu.memory_space<semaphore_mem>>) attributes {dimension_semantics = [#tpu.dimension_semantics<arbitrary>], iteration_bounds = array<i64: 1>, scalar_prefetch = 0 : i64, scratch_operands = 5 : i64, tpu.core_type = #tpu.core_type<tc>, window_params = [{}, {pipeline_mode = #tpu.pipeline_mode<synchronous>, transform_indices = @transform_1, window_bounds = array<i64: 9, 512>}, {pipeline_mode = #tpu.pipeline_mode<synchronous>, transform_indices = @transform_2, window_bounds = array<i64: 16, 8>}, {pipeline_mode = #tpu.pipeline_mode<synchronous>, transform_indices = @transform_3, window_bounds = array<i64: 16, 1>}, {pipeline_mode = #tpu.pipeline_mode<synchronous>, transform_indices = @transform_4, window_bounds = array<i64: 16, 1>}, {pipeline_mode = #tpu.pipeline_mode<synchronous>, transform_indices = @transform_5, window_bounds = array<i64: 16, 144>}, {pipeline_mode = #tpu.pipeline_mode<synchronous>, transform_indices = @transform_6, window_bounds = array<i64: 16, 1>}, {pipeline_mode = #tpu.pipeline_mode<synchronous>, transform_indices = @transform_7, window_bounds = array<i64: 16, 1>}, {pipeline_mode = #tpu.pipeline_mode<synchronous>, transform_indices = @transform_8, window_bounds = array<i64: 8, 16>}, {pipeline_mode = #tpu.pipeline_mode<synchronous>, transform_indices = @transform_9, window_bounds = array<i64: 8, 1>}, {pipeline_mode = #tpu.pipeline_mode<synchronous>, transform_indices = @transform_10, window_bounds = array<i64: 8, 1>}, {}]} {
    %c0_i32 = arith.constant 0 : i32
    %c0_i32_0 = arith.constant 0 : i32
    %c0_i32_1 = arith.constant 0 : i32
    %c0_i32_2 = arith.constant 0 : i32
    %0 = tpu.memref_slice %arg1[%c0_i32, %c0_i32_1, %c0_i32_2] : memref<2x8x256xf32, #tpu.memory_space<any>> -> memref<1x8x256xf32, #tpu.memory_space<any>>
    %1 = tpu.memref_squeeze %0 : memref<1x8x256xf32, #tpu.memory_space<any>> -> memref<8x256xf32, #tpu.memory_space<any>>
    %c0_i32_3 = arith.constant 0 : i32
    %c0_i32_4 = arith.constant 0 : i32
    %2 = tpu.memref_slice %arg13[%c0_i32_3, %c0_i32_4] : memref<8x512xf32, #tpu.memory_space<vmem>> -> memref<8x256xf32, #tpu.memory_space<vmem>>
    %3 = tpu.memref_slice %arg16[%c0_i32_0] : memref<2x!tpu.dma_semaphore, #tpu.memory_space<semaphore_mem>> -> memref<1x!tpu.dma_semaphore, #tpu.memory_space<semaphore_mem>>
    %4 = tpu.memref_squeeze %3 : memref<1x!tpu.dma_semaphore, #tpu.memory_space<semaphore_mem>> -> memref<!tpu.dma_semaphore, #tpu.memory_space<semaphore_mem>>
    tpu.enqueue_dma source(%1 : memref<8x256xf32, #tpu.memory_space<any>>) target(%2 : memref<8x256xf32, #tpu.memory_space<vmem>>) target_semaphore(%4 : memref<!tpu.dma_semaphore, #tpu.memory_space<semaphore_mem>>)
    %c1_i32 = arith.constant 1 : i32
    %c1_i32_5 = arith.constant 1 : i32
    %c0_i32_6 = arith.constant 0 : i32
    %c0_i32_7 = arith.constant 0 : i32
    %5 = tpu.memref_slice %arg1[%c1_i32, %c0_i32_6, %c0_i32_7] : memref<2x8x256xf32, #tpu.memory_space<any>> -> memref<1x8x256xf32, #tpu.memory_space<any>>
    %6 = tpu.memref_squeeze %5 : memref<1x8x256xf32, #tpu.memory_space<any>> -> memref<8x256xf32, #tpu.memory_space<any>>
    %c0_i32_8 = arith.constant 0 : i32
    %c256_i32 = arith.constant 256 : i32
    %7 = tpu.memref_slice %arg13[%c0_i32_8, %c256_i32] : memref<8x512xf32, #tpu.memory_space<vmem>> -> memref<8x256xf32, #tpu.memory_space<vmem>>
    %8 = tpu.memref_slice %arg16[%c1_i32_5] : memref<2x!tpu.dma_semaphore, #tpu.memory_space<semaphore_mem>> -> memref<1x!tpu.dma_semaphore, #tpu.memory_space<semaphore_mem>>
    %9 = tpu.memref_squeeze %8 : memref<1x!tpu.dma_semaphore, #tpu.memory_space<semaphore_mem>> -> memref<!tpu.dma_semaphore, #tpu.memory_space<semaphore_mem>>
    tpu.enqueue_dma source(%6 : memref<8x256xf32, #tpu.memory_space<any>>) target(%7 : memref<8x256xf32, #tpu.memory_space<vmem>>) target_semaphore(%9 : memref<!tpu.dma_semaphore, #tpu.memory_space<semaphore_mem>>)
    %c0_i32_9 = arith.constant 0 : i32
    %c0_i32_10 = arith.constant 0 : i32
    %c0_i32_11 = arith.constant 0 : i32
    %c0_i32_12 = arith.constant 0 : i32
    %10 = tpu.memref_slice %arg1[%c0_i32_9, %c0_i32_11, %c0_i32_12] : memref<2x8x256xf32, #tpu.memory_space<any>> -> memref<1x8x256xf32, #tpu.memory_space<any>>
    %11 = tpu.memref_squeeze %10 : memref<1x8x256xf32, #tpu.memory_space<any>> -> memref<8x256xf32, #tpu.memory_space<any>>
    %c0_i32_13 = arith.constant 0 : i32
    %c0_i32_14 = arith.constant 0 : i32
    %12 = tpu.memref_slice %arg13[%c0_i32_13, %c0_i32_14] : memref<8x512xf32, #tpu.memory_space<vmem>> -> memref<8x256xf32, #tpu.memory_space<vmem>>
    %13 = tpu.memref_slice %arg16[%c0_i32_10] : memref<2x!tpu.dma_semaphore, #tpu.memory_space<semaphore_mem>> -> memref<1x!tpu.dma_semaphore, #tpu.memory_space<semaphore_mem>>
    %14 = tpu.memref_squeeze %13 : memref<1x!tpu.dma_semaphore, #tpu.memory_space<semaphore_mem>> -> memref<!tpu.dma_semaphore, #tpu.memory_space<semaphore_mem>>
    tpu.wait_dma2 semaphore(%14 : memref<!tpu.dma_semaphore, #tpu.memory_space<semaphore_mem>>) src(%11 : memref<8x256xf32, #tpu.memory_space<any>>) dst(%12 : memref<8x256xf32, #tpu.memory_space<vmem>>)
    %c1_i32_15 = arith.constant 1 : i32
    %c1_i32_16 = arith.constant 1 : i32
    %c0_i32_17 = arith.constant 0 : i32
    %c0_i32_18 = arith.constant 0 : i32
    %15 = tpu.memref_slice %arg1[%c1_i32_15, %c0_i32_17, %c0_i32_18] : memref<2x8x256xf32, #tpu.memory_space<any>> -> memref<1x8x256xf32, #tpu.memory_space<any>>
    %16 = tpu.memref_squeeze %15 : memref<1x8x256xf32, #tpu.memory_space<any>> -> memref<8x256xf32, #tpu.memory_space<any>>
    %c0_i32_19 = arith.constant 0 : i32
    %c256_i32_20 = arith.constant 256 : i32
    %17 = tpu.memref_slice %arg13[%c0_i32_19, %c256_i32_20] : memref<8x512xf32, #tpu.memory_space<vmem>> -> memref<8x256xf32, #tpu.memory_space<vmem>>
    %18 = tpu.memref_slice %arg16[%c1_i32_16] : memref<2x!tpu.dma_semaphore, #tpu.memory_space<semaphore_mem>> -> memref<1x!tpu.dma_semaphore, #tpu.memory_space<semaphore_mem>>
    %19 = tpu.memref_squeeze %18 : memref<1x!tpu.dma_semaphore, #tpu.memory_space<semaphore_mem>> -> memref<!tpu.dma_semaphore, #tpu.memory_space<semaphore_mem>>
    tpu.wait_dma2 semaphore(%19 : memref<!tpu.dma_semaphore, #tpu.memory_space<semaphore_mem>>) src(%16 : memref<8x256xf32, #tpu.memory_space<any>>) dst(%17 : memref<8x256xf32, #tpu.memory_space<vmem>>)
    %c0 = arith.constant 0 : index
    %c0_21 = arith.constant 0 : index
    %20 = vector.load %arg13[%c0, %c0_21] : memref<8x512xf32, #tpu.memory_space<vmem>>, vector<8x512xf32>
    %c0_22 = arith.constant 0 : index
    %c0_23 = arith.constant 0 : index
    %21 = vector.load %arg2[%c0_22, %c0_23] : memref<9x512xf32, #tpu.memory_space<vmem>>, vector<9x512xf32>
    %c0_24 = arith.constant 0 : index
    %c0_25 = arith.constant 0 : index
    %22 = vector.load %arg3[%c0_24, %c0_25] : memref<16x8xbf16, #tpu.memory_space<vmem>>, vector<16x8xbf16>
    %23 = arith.truncf %20 : vector<8x512xf32> to vector<8x512xbf16>
    %cst = arith.constant dense<0.000000e+00> : vector<16x512xf32>
    %24 = tpu.matmul %22, %23, %cst {dimension_numbers = #tpu.dot_dimension_numbers<[1], [0], [0], [1], [0, 0, 1, 1], [], []>} : vector<16x8xbf16>, vector<8x512xbf16>, vector<16x512xf32> -> vector<16x512xf32>
    %c0_26 = arith.constant 0 : index
    %c0_27 = arith.constant 0 : index
    %25 = vector.load %arg4[%c0_26, %c0_27] : memref<16x1xf32, #tpu.memory_space<vmem>>, vector<16x1xf32>
    %c0_28 = arith.constant 0 : index
    %c0_29 = arith.constant 0 : index
    %26 = vector.load %arg5[%c0_28, %c0_29] : memref<16x1xf32, #tpu.memory_space<vmem>>, vector<16x1xf32>
    %cst_30 = arith.constant dense<0.000000e+00> : vector<16xf32>
    %27 = vector.multi_reduction <add>, %24, %cst_30 [1] : vector<16x512xf32> to vector<16xf32>
    %28 = vector.shape_cast %27 : vector<16xf32> to vector<16x1xf32>
    %cst_31 = arith.constant 0.001953125 : f32
    %29 = vector.broadcast %cst_31 : f32 to vector<16x1xf32>
    %30 = arith.mulf %28, %29 : vector<16x1xf32>
    %31 = arith.mulf %24, %24 : vector<16x512xf32>
    %cst_32 = arith.constant dense<0.000000e+00> : vector<16xf32>
    %32 = vector.multi_reduction <add>, %31, %cst_32 [1] : vector<16x512xf32> to vector<16xf32>
    %33 = vector.shape_cast %32 : vector<16xf32> to vector<16x1xf32>
    %cst_33 = arith.constant 0.001953125 : f32
    %34 = vector.broadcast %cst_33 : f32 to vector<16x1xf32>
    %35 = arith.mulf %33, %34 : vector<16x1xf32>
    %36 = arith.mulf %30, %30 : vector<16x1xf32>
    %37 = arith.subf %35, %36 : vector<16x1xf32>
    %cst_34 = arith.constant 9.99999974E-6 : f32
    %38 = vector.broadcast %cst_34 : f32 to vector<16x1xf32>
    %39 = arith.addf %37, %38 : vector<16x1xf32>
    %40 = math.rsqrt %39 : vector<16x1xf32>
    %41 = arith.mulf %25, %40 : vector<16x1xf32>
    %42 = arith.mulf %30, %41 : vector<16x1xf32>
    %43 = arith.subf %26, %42 : vector<16x1xf32>
    %44 = vector.broadcast %41 : vector<16x1xf32> to vector<16x512xf32>
    %45 = arith.mulf %24, %44 : vector<16x512xf32>
    %46 = vector.broadcast %43 : vector<16x1xf32> to vector<16x512xf32>
    %47 = arith.addf %45, %46 : vector<16x512xf32>
    %cst_35 = arith.constant 0.000000e+00 : f32
    %48 = vector.broadcast %cst_35 : f32 to vector<16x512xf32>
    %49 = arith.maximumf %47, %48 : vector<16x512xf32>
    %c17_i32 = arith.constant 17 : i32
    %50 = tpu.dynamic_rotate %49 by %c17_i32 dim 1 : vector<16x512xf32>, i32 -> vector<16x512xf32>
    %51 = vector.extract_strided_slice %21 {offsets = [0, 0], sizes = [1, 512], strides = [1, 1]} : vector<9x512xf32> to vector<1x512xf32>
    %52 = vector.broadcast %51 : vector<1x512xf32> to vector<16x512xf32>
    %53 = arith.mulf %50, %52 : vector<16x512xf32>
    %54 = arith.truncf %53 : vector<16x512xf32> to vector<16x512xbf16>
    %c0_36 = arith.constant 0 : index
    %c0_37 = arith.constant 0 : index
    %55 = vector.load %arg15[%c0_36, %c0_37] : memref<144x512xbf16, #tpu.memory_space<vmem>>, vector<16x512xbf16>
    tpu.vector_store %arg15[%c0_36, %c0_37], %54 {strides = array<i32>} : memref<144x512xbf16, #tpu.memory_space<vmem>>, vector<16x512xbf16>,
    %c16_i32 = arith.constant 16 : i32
    %56 = tpu.dynamic_rotate %49 by %c16_i32 dim 1 : vector<16x512xf32>, i32 -> vector<16x512xf32>
    %57 = vector.extract_strided_slice %21 {offsets = [1, 0], sizes = [1, 512], strides = [1, 1]} : vector<9x512xf32> to vector<1x512xf32>
    %58 = vector.broadcast %57 : vector<1x512xf32> to vector<16x512xf32>
    %59 = arith.mulf %56, %58 : vector<16x512xf32>
    %60 = arith.truncf %59 : vector<16x512xf32> to vector<16x512xbf16>
    %c16 = arith.constant 16 : index
    %c0_38 = arith.constant 0 : index
    %61 = vector.load %arg15[%c16, %c0_38] : memref<144x512xbf16, #tpu.memory_space<vmem>>, vector<16x512xbf16>
    tpu.vector_store %arg15[%c16, %c0_38], %60 {strides = array<i32>} : memref<144x512xbf16, #tpu.memory_space<vmem>>, vector<16x512xbf16>,
    %c15_i32 = arith.constant 15 : i32
    %62 = tpu.dynamic_rotate %49 by %c15_i32 dim 1 : vector<16x512xf32>, i32 -> vector<16x512xf32>
    %63 = vector.extract_strided_slice %21 {offsets = [2, 0], sizes = [1, 512], strides = [1, 1]} : vector<9x512xf32> to vector<1x512xf32>
    %64 = vector.broadcast %63 : vector<1x512xf32> to vector<16x512xf32>
    %65 = arith.mulf %62, %64 : vector<16x512xf32>
    %66 = arith.truncf %65 : vector<16x512xf32> to vector<16x512xbf16>
    %c32 = arith.constant 32 : index
    %c0_39 = arith.constant 0 : index
    %67 = vector.load %arg15[%c32, %c0_39] : memref<144x512xbf16, #tpu.memory_space<vmem>>, vector<16x512xbf16>
    tpu.vector_store %arg15[%c32, %c0_39], %66 {strides = array<i32>} : memref<144x512xbf16, #tpu.memory_space<vmem>>, vector<16x512xbf16>,
    %c1_i32_40 = arith.constant 1 : i32
    %68 = tpu.dynamic_rotate %49 by %c1_i32_40 dim 1 : vector<16x512xf32>, i32 -> vector<16x512xf32>
    %69 = vector.extract_strided_slice %21 {offsets = [3, 0], sizes = [1, 512], strides = [1, 1]} : vector<9x512xf32> to vector<1x512xf32>
    %70 = vector.broadcast %69 : vector<1x512xf32> to vector<16x512xf32>
    %71 = arith.mulf %68, %70 : vector<16x512xf32>
    %72 = arith.truncf %71 : vector<16x512xf32> to vector<16x512xbf16>
    %c48 = arith.constant 48 : index
    %c0_41 = arith.constant 0 : index
    %73 = vector.load %arg15[%c48, %c0_41] : memref<144x512xbf16, #tpu.memory_space<vmem>>, vector<16x512xbf16>
    tpu.vector_store %arg15[%c48, %c0_41], %72 {strides = array<i32>} : memref<144x512xbf16, #tpu.memory_space<vmem>>, vector<16x512xbf16>,
    %74 = arith.truncf %49 : vector<16x512xf32> to vector<16x512xbf16>
    %c64 = arith.constant 64 : index
    %c0_42 = arith.constant 0 : index
    %75 = vector.load %arg15[%c64, %c0_42] : memref<144x512xbf16, #tpu.memory_space<vmem>>, vector<16x512xbf16>
    tpu.vector_store %arg15[%c64, %c0_42], %74 {strides = array<i32>} : memref<144x512xbf16, #tpu.memory_space<vmem>>, vector<16x512xbf16>,
    %c511_i32 = arith.constant 511 : i32
    %76 = tpu.dynamic_rotate %49 by %c511_i32 dim 1 : vector<16x512xf32>, i32 -> vector<16x512xf32>
    %77 = vector.extract_strided_slice %21 {offsets = [5, 0], sizes = [1, 512], strides = [1, 1]} : vector<9x512xf32> to vector<1x512xf32>
    %78 = vector.broadcast %77 : vector<1x512xf32> to vector<16x512xf32>
    %79 = arith.mulf %76, %78 : vector<16x512xf32>
    %80 = arith.truncf %79 : vector<16x512xf32> to vector<16x512xbf16>
    %c80 = arith.constant 80 : index
    %c0_43 = arith.constant 0 : index
    %81 = vector.load %arg15[%c80, %c0_43] : memref<144x512xbf16, #tpu.memory_space<vmem>>, vector<16x512xbf16>
    tpu.vector_store %arg15[%c80, %c0_43], %80 {strides = array<i32>} : memref<144x512xbf16, #tpu.memory_space<vmem>>, vector<16x512xbf16>,
    %c497_i32 = arith.constant 497 : i32
    %82 = tpu.dynamic_rotate %49 by %c497_i32 dim 1 : vector<16x512xf32>, i32 -> vector<16x512xf32>
    %83 = vector.extract_strided_slice %21 {offsets = [6, 0], sizes = [1, 512], strides = [1, 1]} : vector<9x512xf32> to vector<1x512xf32>
    %84 = vector.broadcast %83 : vector<1x512xf32> to vector<16x512xf32>
    %85 = arith.mulf %82, %84 : vector<16x512xf32>
    %86 = arith.truncf %85 : vector<16x512xf32> to vector<16x512xbf16>
    %c96 = arith.constant 96 : index
    %c0_44 = arith.constant 0 : index
    %87 = vector.load %arg15[%c96, %c0_44] : memref<144x512xbf16, #tpu.memory_space<vmem>>, vector<16x512xbf16>
    tpu.vector_store %arg15[%c96, %c0_44], %86 {strides = array<i32>} : memref<144x512xbf16, #tpu.memory_space<vmem>>, vector<16x512xbf16>,
    %c496_i32 = arith.constant 496 : i32
    %88 = tpu.dynamic_rotate %49 by %c496_i32 dim 1 : vector<16x512xf32>, i32 -> vector<16x512xf32>
    %89 = vector.extract_strided_slice %21 {offsets = [7, 0], sizes = [1, 512], strides = [1, 1]} : vector<9x512xf32> to vector<1x512xf32>
    %90 = vector.broadcast %89 : vector<1x512xf32> to vector<16x512xf32>
    %91 = arith.mulf %88, %90 : vector<16x512xf32>
    %92 = arith.truncf %91 : vector<16x512xf32> to vector<16x512xbf16>
    %c112 = arith.constant 112 : index
    %c0_45 = arith.constant 0 : index
    %93 = vector.load %arg15[%c112, %c0_45] : memref<144x512xbf16, #tpu.memory_space<vmem>>, vector<16x512xbf16>
    tpu.vector_store %arg15[%c112, %c0_45], %92 {strides = array<i32>} : memref<144x512xbf16, #tpu.memory_space<vmem>>, vector<16x512xbf16>,
    %c495_i32 = arith.constant 495 : i32
    %94 = tpu.dynamic_rotate %49 by %c495_i32 dim 1 : vector<16x512xf32>, i32 -> vector<16x512xf32>
    %95 = vector.extract_strided_slice %21 {offsets = [8, 0], sizes = [1, 512], strides = [1, 1]} : vector<9x512xf32> to vector<1x512xf32>
    %96 = vector.broadcast %95 : vector<1x512xf32> to vector<16x512xf32>
    %97 = arith.mulf %94, %96 : vector<16x512xf32>
    %98 = arith.truncf %97 : vector<16x512xf32> to vector<16x512xbf16>
    %c128 = arith.constant 128 : index
    %c0_46 = arith.constant 0 : index
    %99 = vector.load %arg15[%c128, %c0_46] : memref<144x512xbf16, #tpu.memory_space<vmem>>, vector<16x512xbf16>
    tpu.vector_store %arg15[%c128, %c0_46], %98 {strides = array<i32>} : memref<144x512xbf16, #tpu.memory_space<vmem>>, vector<16x512xbf16>,
    %c0_47 = arith.constant 0 : index
    %c0_48 = arith.constant 0 : index
    %100 = vector.load %arg6[%c0_47, %c0_48] : memref<16x144xbf16, #tpu.memory_space<vmem>>, vector<16x144xbf16>
    %c0_49 = arith.constant 0 : index
    %c0_50 = arith.constant 0 : index
    %101 = vector.load %arg15[%c0_49, %c0_50] : memref<144x512xbf16, #tpu.memory_space<vmem>>, vector<144x512xbf16>
    %cst_51 = arith.constant dense<0.000000e+00> : vector<16x512xf32>
    %102 = tpu.matmul %100, %101, %cst_51 {dimension_numbers = #tpu.dot_dimension_numbers<[1], [0], [0], [1], [0, 0, 1, 1], [], []>} : vector<16x144xbf16>, vector<144x512xbf16>, vector<16x512xf32> -> vector<16x512xf32>
    %c0_52 = arith.constant 0 : index
    %c0_53 = arith.constant 0 : index
    %103 = vector.load %arg7[%c0_52, %c0_53] : memref<16x1xf32, #tpu.memory_space<vmem>>, vector<16x1xf32>
    %c0_54 = arith.constant 0 : index
    %c0_55 = arith.constant 0 : index
    %104 = vector.load %arg8[%c0_54, %c0_55] : memref<16x1xf32, #tpu.memory_space<vmem>>, vector<16x1xf32>
    %cst_56 = arith.constant dense<0.000000e+00> : vector<16xf32>
    %105 = vector.multi_reduction <add>, %102, %cst_56 [1] : vector<16x512xf32> to vector<16xf32>
    %106 = vector.shape_cast %105 : vector<16xf32> to vector<16x1xf32>
    %cst_57 = arith.constant 0.001953125 : f32
    %107 = vector.broadcast %cst_57 : f32 to vector<16x1xf32>
    %108 = arith.mulf %106, %107 : vector<16x1xf32>
    %109 = arith.mulf %102, %102 : vector<16x512xf32>
    %cst_58 = arith.constant dense<0.000000e+00> : vector<16xf32>
    %110 = vector.multi_reduction <add>, %109, %cst_58 [1] : vector<16x512xf32> to vector<16xf32>
    %111 = vector.shape_cast %110 : vector<16xf32> to vector<16x1xf32>
    %cst_59 = arith.constant 0.001953125 : f32
    %112 = vector.broadcast %cst_59 : f32 to vector<16x1xf32>
    %113 = arith.mulf %111, %112 : vector<16x1xf32>
    %114 = arith.mulf %108, %108 : vector<16x1xf32>
    %115 = arith.subf %113, %114 : vector<16x1xf32>
    %cst_60 = arith.constant 9.99999974E-6 : f32
    %116 = vector.broadcast %cst_60 : f32 to vector<16x1xf32>
    %117 = arith.addf %115, %116 : vector<16x1xf32>
    %118 = math.rsqrt %117 : vector<16x1xf32>
    %119 = arith.mulf %103, %118 : vector<16x1xf32>
    %120 = arith.mulf %108, %119 : vector<16x1xf32>
    %121 = arith.subf %104, %120 : vector<16x1xf32>
    %122 = vector.broadcast %119 : vector<16x1xf32> to vector<16x512xf32>
    %123 = arith.mulf %102, %122 : vector<16x512xf32>
    %124 = vector.broadcast %121 : vector<16x1xf32> to vector<16x512xf32>
    %125 = arith.addf %123, %124 : vector<16x512xf32>
    %cst_61 = arith.constant 0.000000e+00 : f32
    %126 = vector.broadcast %cst_61 : f32 to vector<16x512xf32>
    %127 = arith.maximumf %125, %126 : vector<16x512xf32>
    %c0_62 = arith.constant 0 : index
    %c0_63 = arith.constant 0 : index
    %128 = vector.load %arg9[%c0_62, %c0_63] : memref<8x16xbf16, #tpu.memory_space<vmem>>, vector<8x16xbf16>
    %129 = arith.truncf %127 : vector<16x512xf32> to vector<16x512xbf16>
    %cst_64 = arith.constant dense<0.000000e+00> : vector<8x512xf32>
    %130 = tpu.matmul %128, %129, %cst_64 {dimension_numbers = #tpu.dot_dimension_numbers<[1], [0], [0], [1], [0, 0, 1, 1], [], []>} : vector<8x16xbf16>, vector<16x512xbf16>, vector<8x512xf32> -> vector<8x512xf32>
    %c0_65 = arith.constant 0 : index
    %c0_66 = arith.constant 0 : index
    %131 = vector.load %arg10[%c0_65, %c0_66] : memref<8x1xf32, #tpu.memory_space<vmem>>, vector<8x1xf32>
    %c0_67 = arith.constant 0 : index
    %c0_68 = arith.constant 0 : index
    %132 = vector.load %arg11[%c0_67, %c0_68] : memref<8x1xf32, #tpu.memory_space<vmem>>, vector<8x1xf32>
    %cst_69 = arith.constant dense<0.000000e+00> : vector<8xf32>
    %133 = vector.multi_reduction <add>, %130, %cst_69 [1] : vector<8x512xf32> to vector<8xf32>
    %134 = vector.shape_cast %133 : vector<8xf32> to vector<8x1xf32>
    %cst_70 = arith.constant 0.001953125 : f32
    %135 = vector.broadcast %cst_70 : f32 to vector<8x1xf32>
    %136 = arith.mulf %134, %135 : vector<8x1xf32>
    %137 = arith.mulf %130, %130 : vector<8x512xf32>
    %cst_71 = arith.constant dense<0.000000e+00> : vector<8xf32>
    %138 = vector.multi_reduction <add>, %137, %cst_71 [1] : vector<8x512xf32> to vector<8xf32>
    %139 = vector.shape_cast %138 : vector<8xf32> to vector<8x1xf32>
    %cst_72 = arith.constant 0.001953125 : f32
    %140 = vector.broadcast %cst_72 : f32 to vector<8x1xf32>
    %141 = arith.mulf %139, %140 : vector<8x1xf32>
    %142 = arith.mulf %136, %136 : vector<8x1xf32>
    %143 = arith.subf %141, %142 : vector<8x1xf32>
    %cst_73 = arith.constant 9.99999974E-6 : f32
    %144 = vector.broadcast %cst_73 : f32 to vector<8x1xf32>
    %145 = arith.addf %143, %144 : vector<8x1xf32>
    %146 = math.rsqrt %145 : vector<8x1xf32>
    %147 = arith.mulf %131, %146 : vector<8x1xf32>
    %148 = arith.mulf %136, %147 : vector<8x1xf32>
    %149 = arith.subf %132, %148 : vector<8x1xf32>
    %150 = vector.broadcast %147 : vector<8x1xf32> to vector<8x512xf32>
    %151 = arith.mulf %130, %150 : vector<8x512xf32>
    %152 = vector.broadcast %149 : vector<8x1xf32> to vector<8x512xf32>
    %153 = arith.addf %151, %152 : vector<8x512xf32>
    %154 = arith.addf %153, %20 : vector<8x512xf32>
    %cst_74 = arith.constant 0.000000e+00 : f32
    %155 = vector.broadcast %cst_74 : f32 to vector<8x512xf32>
    %156 = arith.maximumf %154, %155 : vector<8x512xf32>
    %c0_75 = arith.constant 0 : index
    %c0_76 = arith.constant 0 : index
    %157 = vector.load %arg14[%c0_75, %c0_76] : memref<8x512xf32, #tpu.memory_space<vmem>>, vector<8x512xf32>
    tpu.vector_store %arg14[%c0_75, %c0_76], %156 {strides = array<i32>} : memref<8x512xf32, #tpu.memory_space<vmem>>, vector<8x512xf32>,
    %c0_i32_77 = arith.constant 0 : i32
    %c0_i32_78 = arith.constant 0 : i32
    %c0_i32_79 = arith.constant 0 : i32
    %c0_i32_80 = arith.constant 0 : i32
    %158 = tpu.memref_slice %arg14[%c0_i32_79, %c0_i32_80] : memref<8x512xf32, #tpu.memory_space<vmem>> -> memref<8x256xf32, #tpu.memory_space<vmem>>
    %c0_i32_81 = arith.constant 0 : i32
    %c0_i32_82 = arith.constant 0 : i32
    %159 = tpu.memref_slice %arg12[%c0_i32_77, %c0_i32_81, %c0_i32_82] : memref<2x8x256xf32, #tpu.memory_space<any>> -> memref<1x8x256xf32, #tpu.memory_space<any>>
    %160 = tpu.memref_squeeze %159 : memref<1x8x256xf32, #tpu.memory_space<any>> -> memref<8x256xf32, #tpu.memory_space<any>>
    %161 = tpu.memref_slice %arg17[%c0_i32_78] : memref<2x!tpu.dma_semaphore, #tpu.memory_space<semaphore_mem>> -> memref<1x!tpu.dma_semaphore, #tpu.memory_space<semaphore_mem>>
    %162 = tpu.memref_squeeze %161 : memref<1x!tpu.dma_semaphore, #tpu.memory_space<semaphore_mem>> -> memref<!tpu.dma_semaphore, #tpu.memory_space<semaphore_mem>>
    tpu.enqueue_dma source(%158 : memref<8x256xf32, #tpu.memory_space<vmem>>) target(%160 : memref<8x256xf32, #tpu.memory_space<any>>) target_semaphore(%162 : memref<!tpu.dma_semaphore, #tpu.memory_space<semaphore_mem>>)
    %c1_i32_83 = arith.constant 1 : i32
    %c1_i32_84 = arith.constant 1 : i32
    %c0_i32_85 = arith.constant 0 : i32
    %c256_i32_86 = arith.constant 256 : i32
    %163 = tpu.memref_slice %arg14[%c0_i32_85, %c256_i32_86] : memref<8x512xf32, #tpu.memory_space<vmem>> -> memref<8x256xf32, #tpu.memory_space<vmem>>
    %c0_i32_87 = arith.constant 0 : i32
    %c0_i32_88 = arith.constant 0 : i32
    %164 = tpu.memref_slice %arg12[%c1_i32_83, %c0_i32_87, %c0_i32_88] : memref<2x8x256xf32, #tpu.memory_space<any>> -> memref<1x8x256xf32, #tpu.memory_space<any>>
    %165 = tpu.memref_squeeze %164 : memref<1x8x256xf32, #tpu.memory_space<any>> -> memref<8x256xf32, #tpu.memory_space<any>>
    %166 = tpu.memref_slice %arg17[%c1_i32_84] : memref<2x!tpu.dma_semaphore, #tpu.memory_space<semaphore_mem>> -> memref<1x!tpu.dma_semaphore, #tpu.memory_space<semaphore_mem>>
    %167 = tpu.memref_squeeze %166 : memref<1x!tpu.dma_semaphore, #tpu.memory_space<semaphore_mem>> -> memref<!tpu.dma_semaphore, #tpu.memory_space<semaphore_mem>>
    tpu.enqueue_dma source(%163 : memref<8x256xf32, #tpu.memory_space<vmem>>) target(%165 : memref<8x256xf32, #tpu.memory_space<any>>) target_semaphore(%167 : memref<!tpu.dma_semaphore, #tpu.memory_space<semaphore_mem>>)
    %c0_i32_89 = arith.constant 0 : i32
    %c0_i32_90 = arith.constant 0 : i32
    %c0_i32_91 = arith.constant 0 : i32
    %c0_i32_92 = arith.constant 0 : i32
    %168 = tpu.memref_slice %arg14[%c0_i32_91, %c0_i32_92] : memref<8x512xf32, #tpu.memory_space<vmem>> -> memref<8x256xf32, #tpu.memory_space<vmem>>
    %c0_i32_93 = arith.constant 0 : i32
    %c0_i32_94 = arith.constant 0 : i32
    %169 = tpu.memref_slice %arg12[%c0_i32_89, %c0_i32_93, %c0_i32_94] : memref<2x8x256xf32, #tpu.memory_space<any>> -> memref<1x8x256xf32, #tpu.memory_space<any>>
    %170 = tpu.memref_squeeze %169 : memref<1x8x256xf32, #tpu.memory_space<any>> -> memref<8x256xf32, #tpu.memory_space<any>>
    %171 = tpu.memref_slice %arg17[%c0_i32_90] : memref<2x!tpu.dma_semaphore, #tpu.memory_space<semaphore_mem>> -> memref<1x!tpu.dma_semaphore, #tpu.memory_space<semaphore_mem>>
    %172 = tpu.memref_squeeze %171 : memref<1x!tpu.dma_semaphore, #tpu.memory_space<semaphore_mem>> -> memref<!tpu.dma_semaphore, #tpu.memory_space<semaphore_mem>>
    tpu.wait_dma2 semaphore(%172 : memref<!tpu.dma_semaphore, #tpu.memory_space<semaphore_mem>>) src(%168 : memref<8x256xf32, #tpu.memory_space<vmem>>) dst(%170 : memref<8x256xf32, #tpu.memory_space<any>>)
    %c1_i32_95 = arith.constant 1 : i32
    %c1_i32_96 = arith.constant 1 : i32
    %c0_i32_97 = arith.constant 0 : i32
    %c256_i32_98 = arith.constant 256 : i32
    %173 = tpu.memref_slice %arg14[%c0_i32_97, %c256_i32_98] : memref<8x512xf32, #tpu.memory_space<vmem>> -> memref<8x256xf32, #tpu.memory_space<vmem>>
    %c0_i32_99 = arith.constant 0 : i32
    %c0_i32_100 = arith.constant 0 : i32
    %174 = tpu.memref_slice %arg12[%c1_i32_95, %c0_i32_99, %c0_i32_100] : memref<2x8x256xf32, #tpu.memory_space<any>> -> memref<1x8x256xf32, #tpu.memory_space<any>>
    %175 = tpu.memref_squeeze %174 : memref<1x8x256xf32, #tpu.memory_space<any>> -> memref<8x256xf32, #tpu.memory_space<any>>
    %176 = tpu.memref_slice %arg17[%c1_i32_96] : memref<2x!tpu.dma_semaphore, #tpu.memory_space<semaphore_mem>> -> memref<1x!tpu.dma_semaphore, #tpu.memory_space<semaphore_mem>>
    %177 = tpu.memref_squeeze %176 : memref<1x!tpu.dma_semaphore, #tpu.memory_space<semaphore_mem>> -> memref<!tpu.dma_semaphore, #tpu.memory_space<semaphore_mem>>
    tpu.wait_dma2 semaphore(%177 : memref<!tpu.dma_semaphore, #tpu.memory_space<semaphore_mem>>) src(%173 : memref<8x256xf32, #tpu.memory_space<vmem>>) dst(%175 : memref<8x256xf32, #tpu.memory_space<any>>)
    return
  }
  func.func @transform_1(%arg0: i32) -> (i32, i32) {
    %c0_i32 = arith.constant 0 : i32
    %c0_i32_0 = arith.constant 0 : i32
    %c0_i32_1 = arith.constant 0 : i32
    return %c0_i32, %c0_i32_0 : i32, i32
  }
  func.func @transform_2(%arg0: i32) -> (i32, i32) {
    %c0_i32 = arith.constant 0 : i32
    %c0_i32_0 = arith.constant 0 : i32
    %c0_i32_1 = arith.constant 0 : i32
    return %c0_i32, %c0_i32_0 : i32, i32
  }
  func.func @transform_3(%arg0: i32) -> (i32, i32) {
    %c0_i32 = arith.constant 0 : i32
    %c0_i32_0 = arith.constant 0 : i32
    %c0_i32_1 = arith.constant 0 : i32
    return %c0_i32, %c0_i32_0 : i32, i32
  }
  func.func @transform_4(%arg0: i32) -> (i32, i32) {
    %c0_i32 = arith.constant 0 : i32
    %c0_i32_0 = arith.constant 0 : i32
    %c0_i32_1 = arith.constant 0 : i32
    return %c0_i32, %c0_i32_0 : i32, i32
  }
  func.func @transform_5(%arg0: i32) -> (i32, i32) {
    %c0_i32 = arith.constant 0 : i32
    %c0_i32_0 = arith.constant 0 : i32
    %c0_i32_1 = arith.constant 0 : i32
    return %c0_i32, %c0_i32_0 : i32, i32
  }
  func.func @transform_6(%arg0: i32) -> (i32, i32) {
    %c0_i32 = arith.constant 0 : i32
    %c0_i32_0 = arith.constant 0 : i32
    %c0_i32_1 = arith.constant 0 : i32
    return %c0_i32, %c0_i32_0 : i32, i32
  }
  func.func @transform_7(%arg0: i32) -> (i32, i32) {
    %c0_i32 = arith.constant 0 : i32
    %c0_i32_0 = arith.constant 0 : i32
    %c0_i32_1 = arith.constant 0 : i32
    return %c0_i32, %c0_i32_0 : i32, i32
  }
  func.func @transform_8(%arg0: i32) -> (i32, i32) {
    %c0_i32 = arith.constant 0 : i32
    %c0_i32_0 = arith.constant 0 : i32
    %c0_i32_1 = arith.constant 0 : i32
    return %c0_i32, %c0_i32_0 : i32, i32
  }
  func.func @transform_9(%arg0: i32) -> (i32, i32) {
    %c0_i32 = arith.constant 0 : i32
    %c0_i32_0 = arith.constant 0 : i32
    %c0_i32_1 = arith.constant 0 : i32
    return %c0_i32, %c0_i32_0 : i32, i32
  }
  func.func @transform_10(%arg0: i32) -> (i32, i32) {
    %c0_i32 = arith.constant 0 : i32
    %c0_i32_0 = arith.constant 0 : i32
    %c0_i32_1 = arith.constant 0 : i32
    return %c0_i32, %c0_i32_0 : i32, i32
  }
}

</mosaic_0001>

<llo_original>
// kernel: tpu_custom_call.1
$region0: #{tpu_custom_call.1}
  #allocation0 [shape = 'u32[]', space=smem, size = 0x4, offset = 0x4, fixed_abs, tag = 'smem constant byte address 0x4 - core index']
  #allocation1 [shape = 'u32[144,128]{1,0:T(1,128)}', space=vmem, size = 0x12000, scoped, tag = 'internal scratch']
  #allocation2 [shape = 'f32[8,512]{1,0:T(8,128)}', space=vmem, size = 0x4000, scoped, tag = 'scratch operand']
  #allocation3 [shape = 'f32[8,512]{1,0:T(8,128)}', space=vmem, size = 0x4000, scoped, tag = 'scratch operand']
  #allocation4 [shape = 'bf16[144,512]{1,0:T(8,128)(2,1)}', space=vmem, size = 0x24000, scoped, tag = 'scratch operand']
  #allocation5 [shape = 's32[2]{0}', space=sflag, size = 0x8, scoped, tag = 'scratch operand']
  #allocation6 [shape = 's32[2]{0}', space=sflag, size = 0x8, scoped, tag = 'scratch operand']
  #allocation9 [shape = 's32[]', space=sflag, size = 0x4, offset = 0, fixed_abs, tag = 'sflag constant byte address 0x0 - dummy sync flag']
  #allocation10 [shape = 's32[]', space=sflag, size = 0x4, offset = 0, fixed_abs, tag = 'sflag constant byte address 0x0 - dummy sync flag']
  #allocation11 [shape = 's32[]', space=sflag, size = 0x4, offset = 0, fixed_abs, tag = 'sflag constant byte address 0x0 - dummy sync flag']
  #allocation12 [shape = 's32[]', space=sflag, size = 0x4, offset = 0, fixed_abs, tag = 'sflag constant byte address 0x0 - dummy sync flag']
  #allocation13 [shape = 'u32[]', space=smem, size = 0x4, offset = 0x44, fixed_abs, tag = 'smem constant byte address 0x44 - assertion arg 0']
  #allocation14 [shape = 'u32[]', space=smem, size = 0x4, offset = 0x48, fixed_abs, tag = 'smem constant byte address 0x48 - assertion arg 1']
  #allocation15 [shape = 's32[]', space=sflag, size = 0x4, offset = 0, fixed_abs, tag = 'sflag constant byte address 0x0 - dummy sync flag']
  #allocation16 [shape = 's32[]', space=sflag, size = 0x4, offset = 0, fixed_abs, tag = 'sflag constant byte address 0x0 - dummy sync flag']
  %s0 = inlined_call_operand.vmem [shape: f32[2,8,256], index: 0, kind: input, shape index: {}]
  %s1 = inlined_call_operand.vmem [shape: f32[9,512], index: 1, kind: input, shape index: {}]
  %s2 = inlined_call_operand.vmem [shape: bf16[16,8], index: 2, kind: input, shape index: {}]
  %s3 = inlined_call_operand.vmem [shape: f32[16,1], index: 3, kind: input, shape index: {}]
  %s4 = inlined_call_operand.vmem [shape: f32[16,1], index: 4, kind: input, shape index: {}]
  %s5 = inlined_call_operand.hbm [shape: bf16[16,144], index: 5, kind: input, shape index: {}]
  %s6 = inlined_call_operand.vmem [shape: f32[16,1], index: 6, kind: input, shape index: {}]
  %s7 = inlined_call_operand.vmem [shape: f32[16,1], index: 7, kind: input, shape index: {}]
  %s8 = inlined_call_operand.vmem [shape: bf16[8,16], index: 8, kind: input, shape index: {}]
  %s9 = inlined_call_operand.vmem [shape: f32[8,1], index: 9, kind: input, shape index: {}]
  %s10 = inlined_call_operand.vmem [shape: f32[8,1], index: 10, kind: input, shape index: {}]
  %s11 = inlined_call_operand.hbm [shape: f32[2,8,256], index: 11, kind: output, shape index: {}]
  %s12 = sld [smem:[#allocation0]]
  $region122: #{tpu_custom_call.1} parent=0
    _
  %s14 = ssub.s32 1, %s12
  %s15 = scalar_select 0, %s14, %s12
  $region1: #{tpu_custom_call.1} parent=0
    #allocation7 [shape = 'u8[8192]{0}', space=vmem, size = 0x2000, scoped, tag = 'input window, operand 5, single buffered']
    #allocation8 [shape = 's32[1]{0}', space=sflag, size = 0x4, scoped, tag = 'scoped memory for tpu_custom_call.1']
    %16 = vsyncpa [#allocation8], 0
    // Predicated region
    $region2: #{tpu_custom_call.1} parent=1 // pred_check
      _
    $region3: #{tpu_custom_call.1} parent=1 // pred_check_branch
      %18 = sbr.rel (0) target = $region5
    $region4: #{tpu_custom_call.1} parent=1 // pred_region
      _
    $region5: #{tpu_custom_call.1} parent=1 // pred_fallthru
      _
    // Predicated region
    $region6: #{tpu_custom_call.1} parent=1 // pred_check
      _
    $region7: #{tpu_custom_call.1} parent=1 // pred_check_branch
      %20 = sbr.rel (0) target = $region9
    $region8: #{tpu_custom_call.1} parent=1 // pred_region
      _
    $region9: #{tpu_custom_call.1} parent=1 // pred_fallthru
      _
    // Predicated region
    $region10: #{tpu_custom_call.1} parent=1 // pred_check
      _
    $region11: #{tpu_custom_call.1} parent=1 // pred_check_branch
      %22 = sbr.rel (0) target = $region13
    $region12: #{tpu_custom_call.1} parent=1 // pred_region
      _
    $region13: #{tpu_custom_call.1} parent=1 // pred_fallthru
      _
    // Predicated region
    $region14: #{tpu_custom_call.1} parent=1 // pred_check
      _
    $region15: #{tpu_custom_call.1} parent=1 // pred_check_branch
      %24 = sbr.rel (0) target = $region17
    $region16: #{tpu_custom_call.1} parent=1 // pred_region
      _
    $region17: #{tpu_custom_call.1} parent=1 // pred_fallthru
      _
    // Predicated region
    $region18: #{tpu_custom_call.1} parent=1 // pred_check
      _
    $region19: #{tpu_custom_call.1} parent=1 // pred_check_branch
      %26 = sbr.rel (0) target = $region21
    $region20: #{tpu_custom_call.1} parent=1 // pred_region
      %s28 = ssub.s32 256, 256
      %29 = vsyncadd [#allocation8], %s28
      %s30 = sshll.u32 [#allocation7], 4
      %s31 = int_to_ptr.vmem [resolvable:$true] %s30
      %36 = dma.hbm_to_vmem [thread:$0]  %s5, 256, %s31, [#allocation8], 128, 128, 8
    $region21: #{tpu_custom_call.1} parent=1 // pred_fallthru
      _
    // Predicated region
    $region22: #{tpu_custom_call.1} parent=1 // pred_check
      _
    $region23: #{tpu_custom_call.1} parent=1 // pred_check_branch
      %38 = sbr.rel (0) target = $region25
    $region24: #{tpu_custom_call.1} parent=1 // pred_region
      _
    $region25: #{tpu_custom_call.1} parent=1 // pred_fallthru
      _
    // Predicated region
    $region26: #{tpu_custom_call.1} parent=1 // pred_check
      _
    $region27: #{tpu_custom_call.1} parent=1 // pred_check_branch
      %40 = sbr.rel (0) target = $region29
    $region28: #{tpu_custom_call.1} parent=1 // pred_region
      _
    $region29: #{tpu_custom_call.1} parent=1 // pred_fallthru
      _
    // Predicated region
    $region30: #{tpu_custom_call.1} parent=1 // pred_check
      _
    $region31: #{tpu_custom_call.1} parent=1 // pred_check_branch
      %42 = sbr.rel (0) target = $region33
    $region32: #{tpu_custom_call.1} parent=1 // pred_region
      _
    $region33: #{tpu_custom_call.1} parent=1 // pred_fallthru
      _
    // Predicated region
    $region34: #{tpu_custom_call.1} parent=1 // pred_check
      _
    $region35: #{tpu_custom_call.1} parent=1 // pred_check_branch
      %44 = sbr.rel (0) target = $region37
    $region36: #{tpu_custom_call.1} parent=1 // pred_region
      _
    $region37: #{tpu_custom_call.1} parent=1 // pred_fallthru
      _
    // Predicated region
    $region38: #{tpu_custom_call.1} parent=1 // pred_check
      _
    $region39: #{tpu_custom_call.1} parent=1 // pred_check_branch
      %46 = sbr.rel (0) target = $region41
    $region40: #{tpu_custom_call.1} parent=1 // pred_region
      _
    $region41: #{tpu_custom_call.1} parent=1 // pred_fallthru
      _
    // Predicated region
    $region42: #{tpu_custom_call.1} parent=1 // pred_check
      _
    $region43: #{tpu_custom_call.1} parent=1 // pred_check_branch
      %48 = sbr.rel (0) target = $region45
    $region44: #{tpu_custom_call.1} parent=1 // pred_region
      %49 = dma.done [#allocation8], 256
    $region45: #{tpu_custom_call.1} parent=1 // pred_fallthru
      _
    %p52 = scmp.lt.u32.totalorder 16, 8
    %p53 = pneg %p52
    // Predicated region
    $region46: #{tpu_custom_call.1} parent=1 // pred_check
      _
    $region47: #{tpu_custom_call.1} parent=1 // pred_check_branch
      %55 = sbr.rel (%p52) target = $region49
    $region48: #{tpu_custom_call.1} parent=1 // pred_region
      %s71 = sand.u32 16, 7
      %p72 = scmp.eq.s32.totalorder %s71, 0
      // Predicated region
      $region61: #{tpu_custom_call.1} parent=48 // pred_check
        %p73 = pneg %p72
      $region62: #{tpu_custom_call.1} parent=48 // pred_check_branch
        %75 = sbr.rel (%p73) target = $region64
      $region63: #{tpu_custom_call.1} parent=48 // pred_region
        loop: start=0, step=1, limit=1
        $region65: #{tpu_custom_call.1} parent=63 // loop_pre_header
          _
        $region66: #{tpu_custom_call.1} parent=63 // loop_header
          %s77 = sphi 0, %s81
          %p78 = scmp.ge.s32.totalorder %s77, 1
          %s82 = sphi %s0, %s0
          %s83 = sphi [#allocation2], [#allocation2]
        $region67: #{tpu_custom_call.1} parent=63 // loop_header_branch
          %80 = sbr.rel (%p78) target = $region71
        $region68: #{tpu_custom_call.1} parent=63 // loop_body
          %v84 = vld [vmem:[%s82] sm:$0xff]
          %85 = vst [vmem:[%s83] sm:$0xff] %v84
          %v86 = vld [vmem:[%s82 + $0x8] sm:$0xff]
          %87 = vst [vmem:[%s83 + $0x8] sm:$0xff] %v86
        $region69: #{tpu_custom_call.1} parent=63 // loop_footer
          %s81 = sadd.s32 1, %s77
        $region70: #{tpu_custom_call.1} parent=63 // loop_footer_branch
          %76 = sbr.rel target = $region66
        $region71: #{tpu_custom_call.1} parent=63 // loop_exit
          _
      $region64: #{tpu_custom_call.1} parent=48 // pred_fallthru
        _
      %p88 = pneg %p72
      // Predicated region
      $region72: #{tpu_custom_call.1} parent=48 // pred_check
        _
      $region73: #{tpu_custom_call.1} parent=48 // pred_check_branch
        %90 = sbr.rel (%p72) target = $region75
      $region74: #{tpu_custom_call.1} parent=48 // pred_region
        %s91 = sand.u32 16, 7
      $region75: #{tpu_custom_call.1} parent=48 // pred_fallthru
        _
    $region49: #{tpu_custom_call.1} parent=1 // pred_fallthru
      _
    // Predicated region
    $region50: #{tpu_custom_call.1} parent=1 // pred_check
      %p56 = pneg %p52
    $region51: #{tpu_custom_call.1} parent=1 // pred_check_branch
      %58 = sbr.rel (%p56) target = $region53
    $region52: #{tpu_custom_call.1} parent=1 // pred_region
      %s59 = sshll.u32 1, 16
      %s60 = ssub.s32 %s59, 1
      loop: start=0, step=1, limit=1
      $region54: #{tpu_custom_call.1} parent=52 // loop_pre_header
        _
      $region55: #{tpu_custom_call.1} parent=52 // loop_header
        %s62 = sphi 0, %s66
        %p63 = scmp.ge.s32.totalorder %s62, 1
        %s67 = sphi %s0, %s0
        %s68 = sphi [#allocation2], [#allocation2]
      $region56: #{tpu_custom_call.1} parent=52 // loop_header_branch
        %65 = sbr.rel (%p63) target = $region60
      $region57: #{tpu_custom_call.1} parent=52 // loop_body
        %v69 = vld [vmem:[%s67] sm:%s60]
        %70 = vst [vmem:[%s68] sm:%s60] %v69
      $region58: #{tpu_custom_call.1} parent=52 // loop_footer
        %s66 = sadd.s32 1, %s62
      $region59: #{tpu_custom_call.1} parent=52 // loop_footer_branch
        %61 = sbr.rel target = $region55
      $region60: #{tpu_custom_call.1} parent=52 // loop_exit
        _
    $region53: #{tpu_custom_call.1} parent=1 // pred_fallthru
      _
    // Predicated region
    $region76: #{tpu_custom_call.1} parent=1 // pred_check
      _
    $region77: #{tpu_custom_call.1} parent=1 // pred_check_branch
      %94 = sbr.rel (0) target = $region79
    $region78: #{tpu_custom_call.1} parent=1 // pred_region
      %95 = vsyncadd [#allocation5], 256
    $region79: #{tpu_custom_call.1} parent=1 // pred_fallthru
      _
    %s96 = scalar_lea.vmem %s0, 16
    %s97 = scalar_lea.vmem [#allocation2], 16
    %s98 = scalar_lea.sflag [#allocation5], 1
    %p100 = scmp.lt.u32.totalorder 16, 8
    %p101 = pneg %p100
    // Predicated region
    $region80: #{tpu_custom_call.1} parent=1 // pred_check
      _
    $region81: #{tpu_custom_call.1} parent=1 // pred_check_branch
      %103 = sbr.rel (%p100) target = $region83
    $region82: #{tpu_custom_call.1} parent=1 // pred_region
      %s119 = sand.u32 16, 7
      %p120 = scmp.eq.s32.totalorder %s119, 0
      // Predicated region
      $region95: #{tpu_custom_call.1} parent=82 // pred_check
        %p121 = pneg %p120
      $region96: #{tpu_custom_call.1} parent=82 // pred_check_branch
        %123 = sbr.rel (%p121) target = $region98
      $region97: #{tpu_custom_call.1} parent=82 // pred_region
        loop: start=0, step=1, limit=1
        $region99: #{tpu_custom_call.1} parent=97 // loop_pre_header
          _
        $region100: #{tpu_custom_call.1} parent=97 // loop_header
          %s125 = sphi 0, %s129
          %p126 = scmp.ge.s32.totalorder %s125, 1
          %s130 = sphi %s96, %s96
          %s131 = sphi %s97, %s97
        $region101: #{tpu_custom_call.1} parent=97 // loop_header_branch
          %128 = sbr.rel (%p126) target = $region105
        $region102: #{tpu_custom_call.1} parent=97 // loop_body
          %v132 = vld [vmem:[%s130] sm:$0xff]
          %133 = vst [vmem:[%s131] sm:$0xff] %v132
          %v134 = vld [vmem:[%s130 + $0x8] sm:$0xff]
          %135 = vst [vmem:[%s131 + $0x8] sm:$0xff] %v134
        $region103: #{tpu_custom_call.1} parent=97 // loop_footer
          %s129 = sadd.s32 1, %s125
        $region104: #{tpu_custom_call.1} parent=97 // loop_footer_branch
          %124 = sbr.rel target = $region100
        $region105: #{tpu_custom_call.1} parent=97 // loop_exit
          _
      $region98: #{tpu_custom_call.1} parent=82 // pred_fallthru
        _
      %p136 = pneg %p120
      // Predicated region
      $region106: #{tpu_custom_call.1} parent=82 // pred_check
        _
      $region107: #{tpu_custom_call.1} parent=82 // pred_check_branch
        %138 = sbr.rel (%p120) target = $region109
      $region108: #{tpu_custom_call.1} parent=82 // pred_region
        %s139 = sand.u32 16, 7
      $region109: #{tpu_custom_call.1} parent=82 // pred_fallthru
        _
    $region83: #{tpu_custom_call.1} parent=1 // pred_fallthru
      _
    // Predicated region
    $region84: #{tpu_custom_call.1} parent=1 // pred_check
      %p104 = pneg %p100
    $region85: #{tpu_custom_call.1} parent=1 // pred_check_branch
      %106 = sbr.rel (%p104) target = $region87
    $region86: #{tpu_custom_call.1} parent=1 // pred_region
      %s107 = sshll.u32 1, 16
      %s108 = ssub.s32 %s107, 1
      loop: start=0, step=1, limit=1
      $region88: #{tpu_custom_call.1} parent=86 // loop_pre_header
        _
      $region89: #{tpu_custom_call.1} parent=86 // loop_header
        %s110 = sphi 0, %s114
        %p111 = scmp.ge.s32.totalorder %s110, 1
        %s115 = sphi %s96, %s96
        %s116 = sphi %s97, %s97
      $region90: #{tpu_custom_call.1} parent=86 // loop_header_branch
        %113 = sbr.rel (%p111) target = $region94
      $region91: #{tpu_custom_call.1} parent=86 // loop_body
        %v117 = vld [vmem:[%s115] sm:%s108]
        %118 = vst [vmem:[%s116] sm:%s108] %v117
      $region92: #{tpu_custom_call.1} parent=86 // loop_footer
        %s114 = sadd.s32 1, %s110
      $region93: #{tpu_custom_call.1} parent=86 // loop_footer_branch
        %109 = sbr.rel target = $region89
      $region94: #{tpu_custom_call.1} parent=86 // loop_exit
        _
    $region87: #{tpu_custom_call.1} parent=1 // pred_fallthru
      _
    // Predicated region
    $region110: #{tpu_custom_call.1} parent=1 // pred_check
      _
    $region111: #{tpu_custom_call.1} parent=1 // pred_check_branch
      %142 = sbr.rel (0) target = $region113
    $region112: #{tpu_custom_call.1} parent=1 // pred_region
      %143 = vsyncadd %s98, 256
    $region113: #{tpu_custom_call.1} parent=1 // pred_fallthru
      _
    %s144 = smul.u32 8, 1
    %s145 = smul.u32 %s144, 2
    %s146 = sshll.u32 %s145, 4
    %147 = dma.done [#allocation5], %s146
    %s148 = sshll.u32 %s145, 4
    %149 = dma.done %s98, %s148
    %v150 = vld [vmem:[#allocation2] sm:$0xff]
    %v151 = vld [vmem:[#allocation2 + $0x8] sm:$0xff]
    %v152 = vld [vmem:[#allocation2 + $0x10] sm:$0xff]
    %v153 = vld [vmem:[#allocation2 + $0x18] sm:$0xff]
    %v154 = vld [vmem:[%s1] sm:$0xff]
    %v155 = vld [vmem:[%s1 + $0x8] sm:$0xff]
    %v156 = vld [vmem:[%s1 + $0x10] sm:$0xff]
    %v157 = vld [vmem:[%s1 + $0x18] sm:$0xff]
    %v158 = vld [vmem:[%s1 + $0x20] sm:$0x1]
    %v159 = vld [vmem:[%s1 + $0x28] sm:$0x1]
    %v160 = vld [vmem:[%s1 + $0x30] sm:$0x1]
    %v161 = vld [vmem:[%s1 + $0x38] sm:$0x1]
    %v162 = vld [vmem:[%s2] sm:$0xf]
    %v163 = vld [vmem:[%s2 + $0x4] sm:$0xf]
    %v164 = vpack.c.bf16 %v150, %v150
    %v165 = vpack.c.bf16 %v151, %v151
    %v166 = vpack.c.bf16 %v152, %v152
    %v167 = vpack.c.bf16 %v153, %v153
    %v170 = vunpack.c.l.b16 %v162
    %v171 = vunpack.c.l.b16 %v163
    %v172 = vpack.c.b16 %v171, %v170
    %vm173 = vcmask 64512
    %v175 = vsel %vm173, %v172, 0
    %vm177 = vcmask 1043456
    %v179 = vsel %vm177, %v164, 0
    %v182 = vsel %vm177, %v165, 0
    %v185 = vsel %vm177, %v166, 0
    %v188 = vsel %vm177, %v167, 0
    %190 = vmatprep.subr.bf16.mxu0 0
    %191 = vmatpush1.bf16.msra.mxu0 0
    %192 = vmatprep.subr.bf16.mxu0 0
    %193 = vmatpush1.bf16.msra.mxu0 0
    %194 = vmatprep.subr.bf16.mxu0 0
    %195 = vmatpush1.bf16.msra.mxu0 0
    %196 = vmatprep.subr.bf16.mxu0 0
    %197 = vmatpush1.bf16.msra.mxu0 0
    %198 = vmatprep.subr.bf16.mxu0 0
    %199 = vmatpush1.bf16.msra.mxu0 0
    %200 = vmatprep.subr.bf16.mxu0 0
    %201 = vmatpush1.bf16.msra.mxu0 0
    %202 = vmatprep.subr.bf16.mxu0 0
    %203 = vmatpush1.bf16.msra.mxu0 0
    %204 = vmatprep.subr.bf16.mxu0 %v182
    %205 = vmatpush1.bf16.msra.mxu0 %v179
    %206 = vmatprep.subr.bf16.mxu0 0
    %207 = vmatpush2.bf16.msra.mxu0 0
    %208 = vmatprep.subr.bf16.mxu0 0
    %209 = vmatpush2.bf16.msra.mxu0 0
    %210 = vmatprep.subr.bf16.mxu0 0
    %211 = vmatpush2.bf16.msra.mxu0 0
    %212 = vmatprep.subr.bf16.mxu0 0
    %213 = vmatpush2.bf16.msra.mxu0 0
    %214 = vmatprep.subr.bf16.mxu0 0
    %215 = vmatpush2.bf16.msra.mxu0 0
    %216 = vmatprep.subr.bf16.mxu0 0
    %217 = vmatpush2.bf16.msra.mxu0 0
    %218 = vmatprep.subr.bf16.mxu0 0
    %219 = vmatpush2.bf16.msra.mxu0 0
    %220 = vmatprep.subr.bf16.mxu0 0
    %221 = vmatpush2.bf16.msra.mxu0 0
    %222 = vmatprep.mubr.bf16.mxu0 0
    %223 = vmatmul.mubr.bf16.gmra.mxu0 %v175
    %v224 = vpop.f32.mrf.mxu0
    %v225 = vadd.f32 0.0, %v224
    %v226 = vpop.f32.mrf.mxu0
    %v227 = vadd.f32 0.0, %v226
    %v228 = vpop.f32.mrf.mxu0
    %v229 = vadd.f32 0.0, %v228
    %v230 = vpop.f32.mrf.mxu0
    %v231 = vadd.f32 0.0, %v230
    %232 = vdwg.mxu0
    %233 = vmatprep.subr.bf16.mxu0 0
    %234 = vmatpush1.bf16.msra.mxu0 0
    %235 = vmatprep.subr.bf16.mxu0 0
    %236 = vmatpush1.bf16.msra.mxu0 0
    %237 = vmatprep.subr.bf16.mxu0 0
    %238 = vmatpush1.bf16.msra.mxu0 0
    %239 = vmatprep.subr.bf16.mxu0 0
    %240 = vmatpush1.bf16.msra.mxu0 0
    %241 = vmatprep.subr.bf16.mxu0 0
    %242 = vmatpush1.bf16.msra.mxu0 0
    %243 = vmatprep.subr.bf16.mxu0 0
    %244 = vmatpush1.bf16.msra.mxu0 0
    %245 = vmatprep.subr.bf16.mxu0 0
    %246 = vmatpush1.bf16.msra.mxu0 0
    %247 = vmatprep.subr.bf16.mxu0 %v188
    %248 = vmatpush1.bf16.msra.mxu0 %v185
    %249 = vmatprep.subr.bf16.mxu0 0
    %250 = vmatpush2.bf16.msra.mxu0 0
    %251 = vmatprep.subr.bf16.mxu0 0
    %252 = vmatpush2.bf16.msra.mxu0 0
    %253 = vmatprep.subr.bf16.mxu0 0
    %254 = vmatpush2.bf16.msra.mxu0 0
    %255 = vmatprep.subr.bf16.mxu0 0
    %256 = vmatpush2.bf16.msra.mxu0 0
    %257 = vmatprep.subr.bf16.mxu0 0
    %258 = vmatpush2.bf16.msra.mxu0 0
    %259 = vmatprep.subr.bf16.mxu0 0
    %260 = vmatpush2.bf16.msra.mxu0 0
    %261 = vmatprep.subr.bf16.mxu0 0
    %262 = vmatpush2.bf16.msra.mxu0 0
    %263 = vmatprep.subr.bf16.mxu0 0
    %264 = vmatpush2.bf16.msra.mxu0 0
    %265 = vmatprep.mubr.bf16.mxu0 0
    %266 = vmatmul.mubr.bf16.gmra.mxu0 %v175
    %v267 = vpop.f32.mrf.mxu0
    %v268 = vadd.f32 0.0, %v267
    %v269 = vpop.f32.mrf.mxu0
    %v270 = vadd.f32 0.0, %v269
    %v271 = vpop.f32.mrf.mxu0
    %v272 = vadd.f32 0.0, %v271
    %v273 = vpop.f32.mrf.mxu0
    %v274 = vadd.f32 0.0, %v273
    %275 = vdwg.mxu0
    %v276 = vld [vmem:[%s3] sm:$0xff]
    %v277 = vld [vmem:[%s3 + $0x8] sm:$0xff]
    %v278 = vld [vmem:[%s4] sm:$0xff]
    %v279 = vld [vmem:[%s4 + $0x8] sm:$0xff]
    %v280 = vadd.f32 %v225, %v227
    %v281 = vadd.f32 %v280, %v268
    %v282 = vadd.f32 %v281, %v270
    %283 = vadd.xlane.f32.xlu0 %v282
    %v284 = vpop.xlane.xlu0 %283
    %v285 = vadd.f32 %v229, %v231
    %v286 = vadd.f32 %v285, %v272
    %v287 = vadd.f32 %v286, %v274
    %288 = vadd.xlane.f32.xlu0 %v287
    %v289 = vpop.xlane.xlu0 %288
    %v290 = vmul.f32 %v284, 0.001953125
    %v291 = vmul.f32 %v289, 0.001953125
    %v292 = vmul.f32 %v225, %v225
    %v293 = vmul.f32 %v227, %v227
    %v294 = vmul.f32 %v268, %v268
    %v295 = vmul.f32 %v270, %v270
    %v296 = vmul.f32 %v229, %v229
    %v297 = vmul.f32 %v231, %v231
    %v298 = vmul.f32 %v272, %v272
    %v299 = vmul.f32 %v274, %v274
    %v300 = vadd.f32 %v292, %v293
    %v301 = vadd.f32 %v300, %v294
    %v302 = vadd.f32 %v301, %v295
    %303 = vadd.xlane.f32.xlu0 %v302
    %v304 = vpop.xlane.xlu0 %303
    %v305 = vadd.f32 %v296, %v297
    %v306 = vadd.f32 %v305, %v298
    %v307 = vadd.f32 %v306, %v299
    %308 = vadd.xlane.f32.xlu0 %v307
    %v309 = vpop.xlane.xlu0 %308
    %v310 = vmul.f32 %v304, 0.001953125
    %v311 = vmul.f32 %v309, 0.001953125
    %v312 = vmul.f32 %v290, %v290
    %v313 = vmul.f32 %v291, %v291
    %v314 = vsub.f32 %v310, %v312
    %v315 = vsub.f32 %v311, %v313
    %v316 = vadd.f32 %v314, 1e-05
    %v317 = vadd.f32 %v315, 1e-05
    %v318 = vrsqrt.pop %v316
    %v319 = vrsqrt.pop %v317
    %v320 = vmul.f32 %v276, %v318
    %v321 = vmul.f32 %v277, %v319
    %v322 = vmul.f32 %v290, %v320
    %v323 = vmul.f32 %v291, %v321
    %v324 = vsub.f32 %v278, %v322
    %v325 = vsub.f32 %v279, %v323
    %327 = vset.pattern.permute.xlu0 0
    %328 = vperm.xlu0 %327, %v320
    %v329 = vpop.permute.xlu0 %328
    %332 = vset.pattern.permute.xlu0 0
    %333 = vperm.xlu0 %332, %v321
    %v334 = vpop.permute.xlu0 %333
    %v336 = vmul.f32 %v225, %v329
    %v337 = vmul.f32 %v227, %v329
    %v338 = vmul.f32 %v268, %v329
    %v339 = vmul.f32 %v270, %v329
    %v340 = vmul.f32 %v229, %v334
    %v341 = vmul.f32 %v231, %v334
    %v342 = vmul.f32 %v272, %v334
    %v343 = vmul.f32 %v274, %v334
    %345 = vset.pattern.permute.xlu0 0
    %346 = vperm.xlu0 %345, %v324
    %v347 = vpop.permute.xlu0 %346
    %350 = vset.pattern.permute.xlu0 0
    %351 = vperm.xlu0 %350, %v325
    %v352 = vpop.permute.xlu0 %351
    %v354 = vadd.f32 %v336, %v347
    %v355 = vadd.f32 %v337, %v347
    %v356 = vadd.f32 %v338, %v347
    %v357 = vadd.f32 %v339, %v347
    %v358 = vadd.f32 %v340, %v352
    %v359 = vadd.f32 %v341, %v352
    %v360 = vadd.f32 %v342, %v352
    %v361 = vadd.f32 %v343, %v352
    %v362 = vmax.f32 %v354, 0.0
    %v363 = vmax.f32 %v355, 0.0
    %v364 = vmax.f32 %v356, 0.0
    %v365 = vmax.f32 %v357, 0.0
    %v366 = vmax.f32 %v358, 0.0
    %v367 = vmax.f32 %v359, 0.0
    %v368 = vmax.f32 %v360, 0.0
    %v369 = vmax.f32 %v361, 0.0
    %370 = vrot.lane.b32.xlu0 %v362, 17
    %v371 = vpop.permute.xlu0 %370
    %372 = vrot.lane.b32.xlu0 %v366, 17
    %v373 = vpop.permute.xlu0 %372
    %374 = vrot.lane.b32.xlu0 %v363, 17
    %v375 = vpop.permute.xlu0 %374
    %376 = vrot.lane.b32.xlu0 %v367, 17
    %v377 = vpop.permute.xlu0 %376
    %378 = vrot.lane.b32.xlu0 %v364, 17
    %v379 = vpop.permute.xlu0 %378
    %380 = vrot.lane.b32.xlu0 %v368, 17
    %v381 = vpop.permute.xlu0 %380
    %382 = vrot.lane.b32.xlu0 %v365, 17
    %v383 = vpop.permute.xlu0 %382
    %384 = vrot.lane.b32.xlu0 %v369, 17
    %v385 = vpop.permute.xlu0 %384
    %v386 = vlaneseq
    %v387 = vand.u32 %v386, 127
    %vm388 = vcmp.lt.s32.totalorder %v387, 17
    %v389 = vsel %vm388, %v379, %v383
    %v390 = vsel %vm388, %v381, %v385
    %v391 = vsel %vm388, %v375, %v379
    %v392 = vsel %vm388, %v377, %v381
    %v393 = vsel %vm388, %v371, %v375
    %v394 = vsel %vm388, %v373, %v377
    %v395 = vsel %vm388, %v383, %v371
    %v396 = vsel %vm388, %v385, %v373
    %v397 = vlaneseq
    %v398 = vshrl.u32 %v397, 7
    %v399 = vsub.s32 0, %v398
    %v400 = vrot.slane %v154, %v399
    %v401 = vlaneseq
    %v402 = vshrl.u32 %v401, 7
    %v403 = vsub.s32 0, %v402
    %v404 = vrot.slane %v155, %v403
    %v405 = vlaneseq
    %v406 = vshrl.u32 %v405, 7
    %v407 = vsub.s32 0, %v406
    %v408 = vrot.slane %v156, %v407
    %v409 = vlaneseq
    %v410 = vshrl.u32 %v409, 7
    %v411 = vsub.s32 0, %v410
    %v412 = vrot.slane %v157, %v411
    %v413 = vmul.f32 %v395, %v400
    %v414 = vmul.f32 %v393, %v404
    %v415 = vmul.f32 %v391, %v408
    %v416 = vmul.f32 %v389, %v412
    %v417 = vmul.f32 %v396, %v400
    %v418 = vmul.f32 %v394, %v404
    %v419 = vmul.f32 %v392, %v408
    %v420 = vmul.f32 %v390, %v412
    %v421 = vpack.c.bf16 %v417, %v413
    %v422 = vpack.c.bf16 %v418, %v414
    %v423 = vpack.c.bf16 %v419, %v415
    %v424 = vpack.c.bf16 %v420, %v416
    %v429 = vunpack.c.l.b16 %v421
    %v430 = vunpack.c.l.b16 %v422
    %v431 = vunpack.c.l.b16 %v423
    %v432 = vunpack.c.l.b16 %v424
    %v433 = vunpack.c.h.b16 %v421
    %v434 = vunpack.c.h.b16 %v422
    %v435 = vunpack.c.h.b16 %v423
    %v436 = vunpack.c.h.b16 %v424
    %v437 = vpack.c.b16 %v430, %v429
    %v438 = vpack.c.b16 %v432, %v431
    %v439 = vpack.c.b16 %v434, %v433
    %v440 = vpack.c.b16 %v436, %v435
    %445 = vst [vmem:[#allocation4] sm:$0xff] %v437
    %446 = vst [vmem:[#allocation4 + $0x8] sm:$0xff] %v438
    %447 = vst [vmem:[#allocation4 + $0x10] sm:$0xff] %v439
    %448 = vst [vmem:[#allocation4 + $0x18] sm:$0xff] %v440
    %449 = vrot.lane.b32.xlu0 %v362, 16
    %v450 = vpop.permute.xlu0 %449
    %451 = vrot.lane.b32.xlu0 %v366, 16
    %v452 = vpop.permute.xlu0 %451
    %453 = vrot.lane.b32.xlu0 %v363, 16
    %v454 = vpop.permute.xlu0 %453
    %455 = vrot.lane.b32.xlu0 %v367, 16
    %v456 = vpop.permute.xlu0 %455
    %457 = vrot.lane.b32.xlu0 %v364, 16
    %v458 = vpop.permute.xlu0 %457
    %459 = vrot.lane.b32.xlu0 %v368, 16
    %v460 = vpop.permute.xlu0 %459
    %461 = vrot.lane.b32.xlu0 %v365, 16
    %v462 = vpop.permute.xlu0 %461
    %463 = vrot.lane.b32.xlu0 %v369, 16
    %v464 = vpop.permute.xlu0 %463
    %vm465 = vcmp.lt.s32.totalorder %v387, 16
    %v466 = vsel %vm465, %v458, %v462
    %v467 = vsel %vm465, %v460, %v464
    %v468 = vsel %vm465, %v454, %v458
    %v469 = vsel %vm465, %v456, %v460
    %v470 = vsel %vm465, %v450, %v454
    %v471 = vsel %vm465, %v452, %v456
    %v472 = vsel %vm465, %v462, %v450
    %v473 = vsel %vm465, %v464, %v452
    %v474 = vlaneseq
    %v475 = vshrl.u32 %v474, 7
    %v476 = vsub.s32 1, %v475
    %v477 = vrot.slane %v154, %v476
    %v478 = vlaneseq
    %v479 = vshrl.u32 %v478, 7
    %v480 = vsub.s32 1, %v479
    %v481 = vrot.slane %v155, %v480
    %v482 = vlaneseq
    %v483 = vshrl.u32 %v482, 7
    %v484 = vsub.s32 1, %v483
    %v485 = vrot.slane %v156, %v484
    %v486 = vlaneseq
    %v487 = vshrl.u32 %v486, 7
    %v488 = vsub.s32 1, %v487
    %v489 = vrot.slane %v157, %v488
    %v490 = vmul.f32 %v472, %v477
    %v491 = vmul.f32 %v470, %v481
    %v492 = vmul.f32 %v468, %v485
    %v493 = vmul.f32 %v466, %v489
    %v494 = vmul.f32 %v473, %v477
    %v495 = vmul.f32 %v471, %v481
    %v496 = vmul.f32 %v469, %v485
    %v497 = vmul.f32 %v467, %v489
    %v498 = vpack.c.bf16 %v494, %v490
    %v499 = vpack.c.bf16 %v495, %v491
    %v500 = vpack.c.bf16 %v496, %v492
    %v501 = vpack.c.bf16 %v497, %v493
    %v506 = vunpack.c.l.b16 %v498
    %v507 = vunpack.c.l.b16 %v499
    %v508 = vunpack.c.l.b16 %v500
    %v509 = vunpack.c.l.b16 %v501
    %v510 = vunpack.c.h.b16 %v498
    %v511 = vunpack.c.h.b16 %v499
    %v512 = vunpack.c.h.b16 %v500
    %v513 = vunpack.c.h.b16 %v501
    %v514 = vpack.c.b16 %v507, %v506
    %v515 = vpack.c.b16 %v509, %v508
    %v516 = vpack.c.b16 %v511, %v510
    %v517 = vpack.c.b16 %v513, %v512
    %522 = vst [vmem:[#allocation4 + $0x20] sm:$0xff] %v514
    %523 = vst [vmem:[#allocation4 + $0x28] sm:$0xff] %v515
    %524 = vst [vmem:[#allocation4 + $0x30] sm:$0xff] %v516
    %525 = vst [vmem:[#allocation4 + $0x38] sm:$0xff] %v517
    %526 = vrot.lane.b32.xlu0 %v362, 15
    %v527 = vpop.permute.xlu0 %526
    %528 = vrot.lane.b32.xlu0 %v366, 15
    %v529 = vpop.permute.xlu0 %528
    %530 = vrot.lane.b32.xlu0 %v363, 15
    %v531 = vpop.permute.xlu0 %530
    %532 = vrot.lane.b32.xlu0 %v367, 15
    %v533 = vpop.permute.xlu0 %532
    %534 = vrot.lane.b32.xlu0 %v364, 15
    %v535 = vpop.permute.xlu0 %534
    %536 = vrot.lane.b32.xlu0 %v368, 15
    %v537 = vpop.permute.xlu0 %536
    %538 = vrot.lane.b32.xlu0 %v365, 15
    %v539 = vpop.permute.xlu0 %538
    %540 = vrot.lane.b32.xlu0 %v369, 15
    %v541 = vpop.permute.xlu0 %540
    %vm542 = vcmp.lt.s32.totalorder %v387, 15
    %v543 = vsel %vm542, %v535, %v539
    %v544 = vsel %vm542, %v537, %v541
    %v545 = vsel %vm542, %v531, %v535
    %v546 = vsel %vm542, %v533, %v537
    %v547 = vsel %vm542, %v527, %v531
    %v548 = vsel %vm542, %v529, %v533
    %v549 = vsel %vm542, %v539, %v527
    %v550 = vsel %vm542, %v541, %v529
    %v551 = vlaneseq
    %v552 = vshrl.u32 %v551, 7
    %v553 = vsub.s32 2, %v552
    %v554 = vrot.slane %v154, %v553
    %v555 = vlaneseq
    %v556 = vshrl.u32 %v555, 7
    %v557 = vsub.s32 2, %v556
    %v558 = vrot.slane %v155, %v557
    %v559 = vlaneseq
    %v560 = vshrl.u32 %v559, 7
    %v561 = vsub.s32 2, %v560
    %v562 = vrot.slane %v156, %v561
    %v563 = vlaneseq
    %v564 = vshrl.u32 %v563, 7
    %v565 = vsub.s32 2, %v564
    %v566 = vrot.slane %v157, %v565
    %v567 = vmul.f32 %v549, %v554
    %v568 = vmul.f32 %v547, %v558
    %v569 = vmul.f32 %v545, %v562
    %v570 = vmul.f32 %v543, %v566
    %v571 = vmul.f32 %v550, %v554
    %v572 = vmul.f32 %v548, %v558
    %v573 = vmul.f32 %v546, %v562
    %v574 = vmul.f32 %v544, %v566
    %v575 = vpack.c.bf16 %v571, %v567
    %v576 = vpack.c.bf16 %v572, %v568
    %v577 = vpack.c.bf16 %v573, %v569
    %v578 = vpack.c.bf16 %v574, %v570
    %v583 = vunpack.c.l.b16 %v575
    %v584 = vunpack.c.l.b16 %v576
    %v585 = vunpack.c.l.b16 %v577
    %v586 = vunpack.c.l.b16 %v578
    %v587 = vunpack.c.h.b16 %v575
    %v588 = vunpack.c.h.b16 %v576
    %v589 = vunpack.c.h.b16 %v577
    %v590 = vunpack.c.h.b16 %v578
    %v591 = vpack.c.b16 %v584, %v583
    %v592 = vpack.c.b16 %v586, %v585
    %v593 = vpack.c.b16 %v588, %v587
    %v594 = vpack.c.b16 %v590, %v589
    %599 = vst [vmem:[#allocation4 + $0x40] sm:$0xff] %v591
    %600 = vst [vmem:[#allocation4 + $0x48] sm:$0xff] %v592
    %601 = vst [vmem:[#allocation4 + $0x50] sm:$0xff] %v593
    %602 = vst [vmem:[#allocation4 + $0x58] sm:$0xff] %v594
    %603 = vrot.lane.b32.xlu0 %v362, 1
    %v604 = vpop.permute.xlu0 %603
    %605 = vrot.lane.b32.xlu0 %v366, 1
    %v606 = vpop.permute.xlu0 %605
    %607 = vrot.lane.b32.xlu0 %v363, 1
    %v608 = vpop.permute.xlu0 %607
    %609 = vrot.lane.b32.xlu0 %v367, 1
    %v610 = vpop.permute.xlu0 %609
    %611 = vrot.lane.b32.xlu0 %v364, 1
    %v612 = vpop.permute.xlu0 %611
    %613 = vrot.lane.b32.xlu0 %v368, 1
    %v614 = vpop.permute.xlu0 %613
    %615 = vrot.lane.b32.xlu0 %v365, 1
    %v616 = vpop.permute.xlu0 %615
    %617 = vrot.lane.b32.xlu0 %v369, 1
    %v618 = vpop.permute.xlu0 %617
    %vm619 = vcmp.lt.s32.totalorder %v387, 1
    %v620 = vsel %vm619, %v612, %v616
    %v621 = vsel %vm619, %v614, %v618
    %v622 = vsel %vm619, %v608, %v612
    %v623 = vsel %vm619, %v610, %v614
    %v624 = vsel %vm619, %v604, %v608
    %v625 = vsel %vm619, %v606, %v610
    %v626 = vsel %vm619, %v616, %v604
    %v627 = vsel %vm619, %v618, %v606
    %v628 = vlaneseq
    %v629 = vshrl.u32 %v628, 7
    %v630 = vsub.s32 3, %v629
    %v631 = vrot.slane %v154, %v630
    %v632 = vlaneseq
    %v633 = vshrl.u32 %v632, 7
    %v634 = vsub.s32 3, %v633
    %v635 = vrot.slane %v155, %v634
    %v636 = vlaneseq
    %v637 = vshrl.u32 %v636, 7
    %v638 = vsub.s32 3, %v637
    %v639 = vrot.slane %v156, %v638
    %v640 = vlaneseq
    %v641 = vshrl.u32 %v640, 7
    %v642 = vsub.s32 3, %v641
    %v643 = vrot.slane %v157, %v642
    %v644 = vmul.f32 %v626, %v631
    %v645 = vmul.f32 %v624, %v635
    %v646 = vmul.f32 %v622, %v639
    %v647 = vmul.f32 %v620, %v643
    %v648 = vmul.f32 %v627, %v631
    %v649 = vmul.f32 %v625, %v635
    %v650 = vmul.f32 %v623, %v639
    %v651 = vmul.f32 %v621, %v643
    %v652 = vpack.c.bf16 %v648, %v644
    %v653 = vpack.c.bf16 %v649, %v645
    %v654 = vpack.c.bf16 %v650, %v646
    %v655 = vpack.c.bf16 %v651, %v647
    %v660 = vunpack.c.l.b16 %v652
    %v661 = vunpack.c.l.b16 %v653
    %v662 = vunpack.c.l.b16 %v654
    %v663 = vunpack.c.l.b16 %v655
    %v664 = vunpack.c.h.b16 %v652
    %v665 = vunpack.c.h.b16 %v653
    %v666 = vunpack.c.h.b16 %v654
    %v667 = vunpack.c.h.b16 %v655
    %v668 = vpack.c.b16 %v661, %v660
    %v669 = vpack.c.b16 %v663, %v662
    %v670 = vpack.c.b16 %v665, %v664
    %v671 = vpack.c.b16 %v667, %v666
    %676 = vst [vmem:[#allocation4 + $0x60] sm:$0xff] %v668
    %677 = vst [vmem:[#allocation4 + $0x68] sm:$0xff] %v669
    %678 = vst [vmem:[#allocation4 + $0x70] sm:$0xff] %v670
    %679 = vst [vmem:[#allocation4 + $0x78] sm:$0xff] %v671
    %v680 = vpack.c.bf16 %v366, %v362
    %v681 = vpack.c.bf16 %v367, %v363
    %v682 = vpack.c.bf16 %v368, %v364
    %v683 = vpack.c.bf16 %v369, %v365
    %v688 = vunpack.c.l.b16 %v680
    %v689 = vunpack.c.l.b16 %v681
    %v690 = vunpack.c.l.b16 %v682
    %v691 = vunpack.c.l.b16 %v683
    %v692 = vunpack.c.h.b16 %v680
    %v693 = vunpack.c.h.b16 %v681
    %v694 = vunpack.c.h.b16 %v682
    %v695 = vunpack.c.h.b16 %v683
    %v696 = vpack.c.b16 %v689, %v688
    %v697 = vpack.c.b16 %v691, %v690
    %v698 = vpack.c.b16 %v693, %v692
    %v699 = vpack.c.b16 %v695, %v694
    %704 = vst [vmem:[#allocation4 + $0x80] sm:$0xff] %v696
    %705 = vst [vmem:[#allocation4 + $0x88] sm:$0xff] %v697
    %706 = vst [vmem:[#allocation4 + $0x90] sm:$0xff] %v698
    %707 = vst [vmem:[#allocation4 + $0x98] sm:$0xff] %v699
    %708 = vrot.lane.b32.xlu0 %v362, 127
    %v709 = vpop.permute.xlu0 %708
    %710 = vrot.lane.b32.xlu0 %v366, 127
    %v711 = vpop.permute.xlu0 %710
    %712 = vrot.lane.b32.xlu0 %v363, 127
    %v713 = vpop.permute.xlu0 %712
    %714 = vrot.lane.b32.xlu0 %v367, 127
    %v715 = vpop.permute.xlu0 %714
    %716 = vrot.lane.b32.xlu0 %v364, 127
    %v717 = vpop.permute.xlu0 %716
    %718 = vrot.lane.b32.xlu0 %v368, 127
    %v719 = vpop.permute.xlu0 %718
    %720 = vrot.lane.b32.xlu0 %v365, 127
    %v721 = vpop.permute.xlu0 %720
    %722 = vrot.lane.b32.xlu0 %v369, 127
    %v723 = vpop.permute.xlu0 %722
    %vm724 = vcmp.lt.s32.totalorder %v387, 127
    %v725 = vsel %vm724, %v717, %v721
    %v726 = vsel %vm724, %v719, %v723
    %v727 = vsel %vm724, %v713, %v717
    %v728 = vsel %vm724, %v715, %v719
    %v729 = vsel %vm724, %v709, %v713
    %v730 = vsel %vm724, %v711, %v715
    %v731 = vsel %vm724, %v721, %v709
    %v732 = vsel %vm724, %v723, %v711
    %v733 = vlaneseq
    %v734 = vshrl.u32 %v733, 7
    %v735 = vsub.s32 5, %v734
    %v736 = vrot.slane %v154, %v735
    %v737 = vlaneseq
    %v738 = vshrl.u32 %v737, 7
    %v739 = vsub.s32 5, %v738
    %v740 = vrot.slane %v155, %v739
    %v741 = vlaneseq
    %v742 = vshrl.u32 %v741, 7
    %v743 = vsub.s32 5, %v742
    %v744 = vrot.slane %v156, %v743
    %v745 = vlaneseq
    %v746 = vshrl.u32 %v745, 7
    %v747 = vsub.s32 5, %v746
    %v748 = vrot.slane %v157, %v747
    %v749 = vmul.f32 %v729, %v736
    %v750 = vmul.f32 %v727, %v740
    %v751 = vmul.f32 %v725, %v744
    %v752 = vmul.f32 %v731, %v748
    %v753 = vmul.f32 %v730, %v736
    %v754 = vmul.f32 %v728, %v740
    %v755 = vmul.f32 %v726, %v744
    %v756 = vmul.f32 %v732, %v748
    %v757 = vpack.c.bf16 %v753, %v749
    %v758 = vpack.c.bf16 %v754, %v750
    %v759 = vpack.c.bf16 %v755, %v751
    %v760 = vpack.c.bf16 %v756, %v752
    %v765 = vunpack.c.l.b16 %v757
    %v766 = vunpack.c.l.b16 %v758
    %v767 = vunpack.c.l.b16 %v759
    %v768 = vunpack.c.l.b16 %v760
    %v769 = vunpack.c.h.b16 %v757
    %v770 = vunpack.c.h.b16 %v758
    %v771 = vunpack.c.h.b16 %v759
    %v772 = vunpack.c.h.b16 %v760
    %v773 = vpack.c.b16 %v766, %v765
    %v774 = vpack.c.b16 %v768, %v767
    %v775 = vpack.c.b16 %v770, %v769
    %v776 = vpack.c.b16 %v772, %v771
    %781 = vst [vmem:[#allocation4 + $0xa0] sm:$0xff] %v773
    %782 = vst [vmem:[#allocation4 + $0xa8] sm:$0xff] %v774
    %783 = vst [vmem:[#allocation4 + $0xb0] sm:$0xff] %v775
    %784 = vst [vmem:[#allocation4 + $0xb8] sm:$0xff] %v776
    %785 = vrot.lane.b32.xlu0 %v362, 113
    %v786 = vpop.permute.xlu0 %785
    %787 = vrot.lane.b32.xlu0 %v366, 113
    %v788 = vpop.permute.xlu0 %787
    %789 = vrot.lane.b32.xlu0 %v363, 113
    %v790 = vpop.permute.xlu0 %789
    %791 = vrot.lane.b32.xlu0 %v367, 113
    %v792 = vpop.permute.xlu0 %791
    %793 = vrot.lane.b32.xlu0 %v364, 113
    %v794 = vpop.permute.xlu0 %793
    %795 = vrot.lane.b32.xlu0 %v368, 113
    %v796 = vpop.permute.xlu0 %795
    %797 = vrot.lane.b32.xlu0 %v365, 113
    %v798 = vpop.permute.xlu0 %797
    %799 = vrot.lane.b32.xlu0 %v369, 113
    %v800 = vpop.permute.xlu0 %799
    %vm801 = vcmp.lt.s32.totalorder %v387, 113
    %v802 = vsel %vm801, %v794, %v798
    %v803 = vsel %vm801, %v796, %v800
    %v804 = vsel %vm801, %v790, %v794
    %v805 = vsel %vm801, %v792, %v796
    %v806 = vsel %vm801, %v786, %v790
    %v807 = vsel %vm801, %v788, %v792
    %v808 = vsel %vm801, %v798, %v786
    %v809 = vsel %vm801, %v800, %v788
    %v810 = vlaneseq
    %v811 = vshrl.u32 %v810, 7
    %v812 = vsub.s32 6, %v811
    %v813 = vrot.slane %v154, %v812
    %v814 = vlaneseq
    %v815 = vshrl.u32 %v814, 7
    %v816 = vsub.s32 6, %v815
    %v817 = vrot.slane %v155, %v816
    %v818 = vlaneseq
    %v819 = vshrl.u32 %v818, 7
    %v820 = vsub.s32 6, %v819
    %v821 = vrot.slane %v156, %v820
    %v822 = vlaneseq
    %v823 = vshrl.u32 %v822, 7
    %v824 = vsub.s32 6, %v823
    %v825 = vrot.slane %v157, %v824
    %v826 = vmul.f32 %v806, %v813
    %v827 = vmul.f32 %v804, %v817
    %v828 = vmul.f32 %v802, %v821
    %v829 = vmul.f32 %v808, %v825
    %v830 = vmul.f32 %v807, %v813
    %v831 = vmul.f32 %v805, %v817
    %v832 = vmul.f32 %v803, %v821
    %v833 = vmul.f32 %v809, %v825
    %v834 = vpack.c.bf16 %v830, %v826
    %v835 = vpack.c.bf16 %v831, %v827
    %v836 = vpack.c.bf16 %v832, %v828
    %v837 = vpack.c.bf16 %v833, %v829
    %v842 = vunpack.c.l.b16 %v834
    %v843 = vunpack.c.l.b16 %v835
    %v844 = vunpack.c.l.b16 %v836
    %v845 = vunpack.c.l.b16 %v837
    %v846 = vunpack.c.h.b16 %v834
    %v847 = vunpack.c.h.b16 %v835
    %v848 = vunpack.c.h.b16 %v836
    %v849 = vunpack.c.h.b16 %v837
    %v850 = vpack.c.b16 %v843, %v842
    %v851 = vpack.c.b16 %v845, %v844
    %v852 = vpack.c.b16 %v847, %v846
    %v853 = vpack.c.b16 %v849, %v848
    %858 = vst [vmem:[#allocation4 + $0xc0] sm:$0xff] %v850
    %859 = vst [vmem:[#allocation4 + $0xc8] sm:$0xff] %v851
    %860 = vst [vmem:[#allocation4 + $0xd0] sm:$0xff] %v852
    %861 = vst [vmem:[#allocation4 + $0xd8] sm:$0xff] %v853
    %862 = vrot.lane.b32.xlu0 %v362, 112
    %v863 = vpop.permute.xlu0 %862
    %864 = vrot.lane.b32.xlu0 %v366, 112
    %v865 = vpop.permute.xlu0 %864
    %866 = vrot.lane.b32.xlu0 %v363, 112
    %v867 = vpop.permute.xlu0 %866
    %868 = vrot.lane.b32.xlu0 %v367, 112
    %v869 = vpop.permute.xlu0 %868
    %870 = vrot.lane.b32.xlu0 %v364, 112
    %v871 = vpop.permute.xlu0 %870
    %872 = vrot.lane.b32.xlu0 %v368, 112
    %v873 = vpop.permute.xlu0 %872
    %874 = vrot.lane.b32.xlu0 %v365, 112
    %v875 = vpop.permute.xlu0 %874
    %876 = vrot.lane.b32.xlu0 %v369, 112
    %v877 = vpop.permute.xlu0 %876
    %vm878 = vcmp.lt.s32.totalorder %v387, 112
    %v879 = vsel %vm878, %v871, %v875
    %v880 = vsel %vm878, %v873, %v877
    %v881 = vsel %vm878, %v867, %v871
    %v882 = vsel %vm878, %v869, %v873
    %v883 = vsel %vm878, %v863, %v867
    %v884 = vsel %vm878, %v865, %v869
    %v885 = vsel %vm878, %v875, %v863
    %v886 = vsel %vm878, %v877, %v865
    %v887 = vlaneseq
    %v888 = vshrl.u32 %v887, 7
    %v889 = vsub.s32 7, %v888
    %v890 = vrot.slane %v154, %v889
    %v891 = vlaneseq
    %v892 = vshrl.u32 %v891, 7
    %v893 = vsub.s32 7, %v892
    %v894 = vrot.slane %v155, %v893
    %v895 = vlaneseq
    %v896 = vshrl.u32 %v895, 7
    %v897 = vsub.s32 7, %v896
    %v898 = vrot.slane %v156, %v897
    %v899 = vlaneseq
    %v900 = vshrl.u32 %v899, 7
    %v901 = vsub.s32 7, %v900
    %v902 = vrot.slane %v157, %v901
    %v903 = vmul.f32 %v883, %v890
    %v904 = vmul.f32 %v881, %v894
    %v905 = vmul.f32 %v879, %v898
    %v906 = vmul.f32 %v885, %v902
    %v907 = vmul.f32 %v884, %v890
    %v908 = vmul.f32 %v882, %v894
    %v909 = vmul.f32 %v880, %v898
    %v910 = vmul.f32 %v886, %v902
    %v911 = vpack.c.bf16 %v907, %v903
    %v912 = vpack.c.bf16 %v908, %v904
    %v913 = vpack.c.bf16 %v909, %v905
    %v914 = vpack.c.bf16 %v910, %v906
    %v919 = vunpack.c.l.b16 %v911
    %v920 = vunpack.c.l.b16 %v912
    %v921 = vunpack.c.l.b16 %v913
    %v922 = vunpack.c.l.b16 %v914
    %v923 = vunpack.c.h.b16 %v911
    %v924 = vunpack.c.h.b16 %v912
    %v925 = vunpack.c.h.b16 %v913
    %v926 = vunpack.c.h.b16 %v914
    %v927 = vpack.c.b16 %v920, %v919
    %v928 = vpack.c.b16 %v922, %v921
    %v929 = vpack.c.b16 %v924, %v923
    %v930 = vpack.c.b16 %v926, %v925
    %935 = vst [vmem:[#allocation4 + $0xe0] sm:$0xff] %v927
    %936 = vst [vmem:[#allocation4 + $0xe8] sm:$0xff] %v928
    %937 = vst [vmem:[#allocation4 + $0xf0] sm:$0xff] %v929
    %938 = vst [vmem:[#allocation4 + $0xf8] sm:$0xff] %v930
    %939 = vrot.lane.b32.xlu0 %v362, 111
    %v940 = vpop.permute.xlu0 %939
    %941 = vrot.lane.b32.xlu0 %v366, 111
    %v942 = vpop.permute.xlu0 %941
    %943 = vrot.lane.b32.xlu0 %v363, 111
    %v944 = vpop.permute.xlu0 %943
    %945 = vrot.lane.b32.xlu0 %v367, 111
    %v946 = vpop.permute.xlu0 %945
    %947 = vrot.lane.b32.xlu0 %v364, 111
    %v948 = vpop.permute.xlu0 %947
    %949 = vrot.lane.b32.xlu0 %v368, 111
    %v950 = vpop.permute.xlu0 %949
    %951 = vrot.lane.b32.xlu0 %v365, 111
    %v952 = vpop.permute.xlu0 %951
    %953 = vrot.lane.b32.xlu0 %v369, 111
    %v954 = vpop.permute.xlu0 %953
    %vm955 = vcmp.lt.s32.totalorder %v387, 111
    %v956 = vsel %vm955, %v948, %v952
    %v957 = vsel %vm955, %v950, %v954
    %v958 = vsel %vm955, %v944, %v948
    %v959 = vsel %vm955, %v946, %v950
    %v960 = vsel %vm955, %v940, %v944
    %v961 = vsel %vm955, %v942, %v946
    %v962 = vsel %vm955, %v952, %v940
    %v963 = vsel %vm955, %v954, %v942
    %v964 = vlaneseq
    %v965 = vshrl.u32 %v964, 7
    %v966 = vsub.s32 0, %v965
    %v967 = vrot.slane %v158, %v966
    %v968 = vlaneseq
    %v969 = vshrl.u32 %v968, 7
    %v970 = vsub.s32 0, %v969
    %v971 = vrot.slane %v159, %v970
    %v972 = vlaneseq
    %v973 = vshrl.u32 %v972, 7
    %v974 = vsub.s32 0, %v973
    %v975 = vrot.slane %v160, %v974
    %v976 = vlaneseq
    %v977 = vshrl.u32 %v976, 7
    %v978 = vsub.s32 0, %v977
    %v979 = vrot.slane %v161, %v978
    %v980 = vmul.f32 %v960, %v967
    %v981 = vmul.f32 %v958, %v971
    %v982 = vmul.f32 %v956, %v975
    %v983 = vmul.f32 %v962, %v979
    %v984 = vmul.f32 %v961, %v967
    %v985 = vmul.f32 %v959, %v971
    %v986 = vmul.f32 %v957, %v975
    %v987 = vmul.f32 %v963, %v979
    %v988 = vpack.c.bf16 %v984, %v980
    %v989 = vpack.c.bf16 %v985, %v981
    %v990 = vpack.c.bf16 %v986, %v982
    %v991 = vpack.c.bf16 %v987, %v983
    %v996 = vunpack.c.l.b16 %v988
    %v997 = vunpack.c.l.b16 %v989
    %v998 = vunpack.c.l.b16 %v990
    %v999 = vunpack.c.l.b16 %v991
    %v1000 = vunpack.c.h.b16 %v988
    %v1001 = vunpack.c.h.b16 %v989
    %v1002 = vunpack.c.h.b16 %v990
    %v1003 = vunpack.c.h.b16 %v991
    %v1004 = vpack.c.b16 %v997, %v996
    %v1005 = vpack.c.b16 %v999, %v998
    %v1006 = vpack.c.b16 %v1001, %v1000
    %v1007 = vpack.c.b16 %v1003, %v1002
    %1012 = vst [vmem:[#allocation4 + $0x100] sm:$0xff] %v1004
    %1013 = vst [vmem:[#allocation4 + $0x108] sm:$0xff] %v1005
    %1014 = vst [vmem:[#allocation4 + $0x110] sm:$0xff] %v1006
    %1015 = vst [vmem:[#allocation4 + $0x118] sm:$0xff] %v1007
    %v1016 = vld [vmem:[#allocation7] sm:$0xff]
    %v1017 = vld [vmem:[#allocation7 + $0x8] sm:$0xff]
    %v1018 = vld [vmem:[#allocation4] sm:$0xff]
    %v1019 = vld [vmem:[#allocation4 + $0x8] sm:$0xff]
    %v1020 = vld [vmem:[#allocation4 + $0x10] sm:$0xff]
    %v1021 = vld [vmem:[#allocation4 + $0x18] sm:$0xff]
    %v1022 = vld [vmem:[#allocation4 + $0x20] sm:$0xff]
    %v1023 = vld [vmem:[#allocation4 + $0x28] sm:$0xff]
    %v1024 = vld [vmem:[#allocation4 + $0x30] sm:$0xff]
    %v1025 = vld [vmem:[#allocation4 + $0x38] sm:$0xff]
    %v1026 = vld [vmem:[#allocation4 + $0x40] sm:$0xff]
    %v1027 = vld [vmem:[#allocation4 + $0x48] sm:$0xff]
    %v1028 = vld [vmem:[#allocation4 + $0x50] sm:$0xff]
    %v1029 = vld [vmem:[#allocation4 + $0x58] sm:$0xff]
    %v1030 = vld [vmem:[#allocation4 + $0x60] sm:$0xff]
    %v1031 = vld [vmem:[#allocation4 + $0x68] sm:$0xff]
    %v1032 = vld [vmem:[#allocation4 + $0x70] sm:$0xff]
    %v1033 = vld [vmem:[#allocation4 + $0x78] sm:$0xff]
    %v1034 = vld [vmem:[#allocation4 + $0x80] sm:$0xff]
    %v1035 = vld [vmem:[#allocation4 + $0x88] sm:$0xff]
    %v1036 = vld [vmem:[#allocation4 + $0x90] sm:$0xff]
    %v1037 = vld [vmem:[#allocation4 + $0x98] sm:$0xff]
    %v1038 = vld [vmem:[#allocation4 + $0xa0] sm:$0xff]
    %v1039 = vld [vmem:[#allocation4 + $0xa8] sm:$0xff]
    %v1040 = vld [vmem:[#allocation4 + $0xb0] sm:$0xff]
    %v1041 = vld [vmem:[#allocation4 + $0xb8] sm:$0xff]
    %v1042 = vld [vmem:[#allocation4 + $0xc0] sm:$0xff]
    %v1043 = vld [vmem:[#allocation4 + $0xc8] sm:$0xff]
    %v1044 = vld [vmem:[#allocation4 + $0xd0] sm:$0xff]
    %v1045 = vld [vmem:[#allocation4 + $0xd8] sm:$0xff]
    %v1046 = vld [vmem:[#allocation4 + $0xe0] sm:$0xff]
    %v1047 = vld [vmem:[#allocation4 + $0xe8] sm:$0xff]
    %v1048 = vld [vmem:[#allocation4 + $0xf0] sm:$0xff]
    %v1049 = vld [vmem:[#allocation4 + $0xf8] sm:$0xff]
    %v1050 = vld [vmem:[#allocation4 + $0x100] sm:$0xff]
    %v1051 = vld [vmem:[#allocation4 + $0x108] sm:$0xff]
    %v1052 = vld [vmem:[#allocation4 + $0x110] sm:$0xff]
    %v1053 = vld [vmem:[#allocation4 + $0x118] sm:$0xff]
    %v1056 = vunpack.c.l.b16 %v1016
    %v1057 = vunpack.c.h.b16 %v1016
    %v1058 = vunpack.c.l.b16 %v1017
    %v1059 = vunpack.c.h.b16 %v1017
    %v1060 = vpack.c.b16 %v1058, %v1056
    %v1061 = vpack.c.b16 %v1059, %v1057
    %v1099 = vunpack.c.l.b16 %v1018
    %v1100 = vunpack.c.h.b16 %v1018
    %v1101 = vunpack.c.l.b16 %v1019
    %v1102 = vunpack.c.h.b16 %v1019
    %v1103 = vunpack.c.l.b16 %v1020
    %v1104 = vunpack.c.h.b16 %v1020
    %v1105 = vunpack.c.l.b16 %v1021
    %v1106 = vunpack.c.h.b16 %v1021
    %v1107 = vunpack.c.l.b16 %v1022
    %v1108 = vunpack.c.h.b16 %v1022
    %v1109 = vunpack.c.l.b16 %v1023
    %v1110 = vunpack.c.h.b16 %v1023
    %v1111 = vunpack.c.l.b16 %v1024
    %v1112 = vunpack.c.h.b16 %v1024
    %v1113 = vunpack.c.l.b16 %v1025
    %v1114 = vunpack.c.h.b16 %v1025
    %v1115 = vunpack.c.l.b16 %v1026
    %v1116 = vunpack.c.h.b16 %v1026
    %v1117 = vunpack.c.l.b16 %v1027
    %v1118 = vunpack.c.h.b16 %v1027
    %v1119 = vunpack.c.l.b16 %v1028
    %v1120 = vunpack.c.h.b16 %v1028
    %v1121 = vunpack.c.l.b16 %v1029
    %v1122 = vunpack.c.h.b16 %v1029
    %v1123 = vunpack.c.l.b16 %v1030
    %v1124 = vunpack.c.h.b16 %v1030
    %v1125 = vunpack.c.l.b16 %v1031
    %v1126 = vunpack.c.h.b16 %v1031
    %v1127 = vunpack.c.l.b16 %v1032
    %v1128 = vunpack.c.h.b16 %v1032
    %v1129 = vunpack.c.l.b16 %v1033
    %v1130 = vunpack.c.h.b16 %v1033
    %v1131 = vunpack.c.l.b16 %v1034
    %v1132 = vunpack.c.h.b16 %v1034
    %v1133 = vunpack.c.l.b16 %v1035
    %v1134 = vunpack.c.h.b16 %v1035
    %v1135 = vunpack.c.l.b16 %v1036
    %v1136 = vunpack.c.h.b16 %v1036
    %v1137 = vunpack.c.l.b16 %v1037
    %v1138 = vunpack.c.h.b16 %v1037
    %v1139 = vunpack.c.l.b16 %v1038
    %v1140 = vunpack.c.h.b16 %v1038
    %v1141 = vunpack.c.l.b16 %v1039
    %v1142 = vunpack.c.h.b16 %v1039
    %v1143 = vunpack.c.l.b16 %v1040
    %v1144 = vunpack.c.h.b16 %v1040
    %v1145 = vunpack.c.l.b16 %v1041
    %v1146 = vunpack.c.h.b16 %v1041
    %v1147 = vunpack.c.l.b16 %v1042
    %v1148 = vunpack.c.h.b16 %v1042
    %v1149 = vunpack.c.l.b16 %v1043
    %v1150 = vunpack.c.h.b16 %v1043
    %v1151 = vunpack.c.l.b16 %v1044
    %v1152 = vunpack.c.h.b16 %v1044
    %v1153 = vunpack.c.l.b16 %v1045
    %v1154 = vunpack.c.h.b16 %v1045
    %v1155 = vunpack.c.l.b16 %v1046
    %v1156 = vunpack.c.h.b16 %v1046
    %v1157 = vunpack.c.l.b16 %v1047
    %v1158 = vunpack.c.h.b16 %v1047
    %v1159 = vunpack.c.l.b16 %v1048
    %v1160 = vunpack.c.h.b16 %v1048
    %v1161 = vunpack.c.l.b16 %v1049
    %v1162 = vunpack.c.h.b16 %v1049
    %v1163 = vunpack.c.l.b16 %v1050
    %v1164 = vunpack.c.h.b16 %v1050
    %v1165 = vunpack.c.l.b16 %v1051
    %v1166 = vunpack.c.h.b16 %v1051
    %v1167 = vunpack.c.l.b16 %v1052
    %v1168 = vunpack.c.h.b16 %v1052
    %v1169 = vunpack.c.l.b16 %v1053
    %v1170 = vunpack.c.h.b16 %v1053
    %v1171 = vpack.c.b16 %v1103, %v1099
    %v1172 = vpack.c.b16 %v1104, %v1100
    %v1173 = vpack.c.b16 %v1105, %v1101
    %v1174 = vpack.c.b16 %v1106, %v1102
    %v1175 = vpack.c.b16 %v1111, %v1107
    %v1176 = vpack.c.b16 %v1112, %v1108
    %v1177 = vpack.c.b16 %v1113, %v1109
    %v1178 = vpack.c.b16 %v1114, %v1110
    %v1179 = vpack.c.b16 %v1119, %v1115
    %v1180 = vpack.c.b16 %v1120, %v1116
    %v1181 = vpack.c.b16 %v1121, %v1117
    %v1182 = vpack.c.b16 %v1122, %v1118
    %v1183 = vpack.c.b16 %v1127, %v1123
    %v1184 = vpack.c.b16 %v1128, %v1124
    %v1185 = vpack.c.b16 %v1129, %v1125
    %v1186 = vpack.c.b16 %v1130, %v1126
    %v1187 = vpack.c.b16 %v1135, %v1131
    %v1188 = vpack.c.b16 %v1136, %v1132
    %v1189 = vpack.c.b16 %v1137, %v1133
    %v1190 = vpack.c.b16 %v1138, %v1134
    %v1191 = vpack.c.b16 %v1143, %v1139
    %v1192 = vpack.c.b16 %v1144, %v1140
    %v1193 = vpack.c.b16 %v1145, %v1141
    %v1194 = vpack.c.b16 %v1146, %v1142
    %v1195 = vpack.c.b16 %v1151, %v1147
    %v1196 = vpack.c.b16 %v1152, %v1148
    %v1197 = vpack.c.b16 %v1153, %v1149
    %v1198 = vpack.c.b16 %v1154, %v1150
    %v1199 = vpack.c.b16 %v1159, %v1155
    %v1200 = vpack.c.b16 %v1160, %v1156
    %v1201 = vpack.c.b16 %v1161, %v1157
    %v1202 = vpack.c.b16 %v1162, %v1158
    %v1203 = vpack.c.b16 %v1167, %v1163
    %v1204 = vpack.c.b16 %v1168, %v1164
    %v1205 = vpack.c.b16 %v1169, %v1165
    %v1206 = vpack.c.b16 %v1170, %v1166
    %vm1243 = vcmask 130048
    %v1245 = vsel %vm1243, %v1061, 0
    %1247 = vmatprep.subr.bf16.mxu0 %v1200
    %1248 = vmatpush1.bf16.msra.mxu0 %v1199
    %1249 = vmatprep.subr.bf16.mxu0 %v1196
    %1250 = vmatpush1.bf16.msra.mxu0 %v1195
    %1251 = vmatprep.subr.bf16.mxu0 %v1192
    %1252 = vmatpush1.bf16.msra.mxu0 %v1191
    %1253 = vmatprep.subr.bf16.mxu0 %v1188
    %1254 = vmatpush1.bf16.msra.mxu0 %v1187
    %1255 = vmatprep.subr.bf16.mxu0 %v1184
    %1256 = vmatpush1.bf16.msra.mxu0 %v1183
    %1257 = vmatprep.subr.bf16.mxu0 %v1180
    %1258 = vmatpush1.bf16.msra.mxu0 %v1179
    %1259 = vmatprep.subr.bf16.mxu0 %v1176
    %1260 = vmatpush1.bf16.msra.mxu0 %v1175
    %1261 = vmatprep.subr.bf16.mxu0 %v1172
    %1262 = vmatpush1.bf16.msra.mxu0 %v1171
    %1263 = vmatprep.subr.bf16.mxu0 0
    %1264 = vmatpush2.bf16.msra.mxu0 0
    %1265 = vmatprep.subr.bf16.mxu0 0
    %1266 = vmatpush2.bf16.msra.mxu0 0
    %1267 = vmatprep.subr.bf16.mxu0 0
    %1268 = vmatpush2.bf16.msra.mxu0 0
    %1269 = vmatprep.subr.bf16.mxu0 0
    %1270 = vmatpush2.bf16.msra.mxu0 0
    %1271 = vmatprep.subr.bf16.mxu0 0
    %1272 = vmatpush2.bf16.msra.mxu0 0
    %1273 = vmatprep.subr.bf16.mxu0 0
    %1274 = vmatpush2.bf16.msra.mxu0 0
    %1275 = vmatprep.subr.bf16.mxu0 0
    %1276 = vmatpush2.bf16.msra.mxu0 0
    %1277 = vmatprep.subr.bf16.mxu0 %v1204
    %1278 = vmatpush2.bf16.msra.mxu0 %v1203
    %1279 = vmatprep.mubr.bf16.mxu0 %v1245
    %1280 = vmatmul.mubr.bf16.gmra.mxu0 %v1060
    %v1281 = vpop.f32.mrf.mxu0
    %v1282 = vadd.f32 0.0, %v1281
    %v1283 = vpop.f32.mrf.mxu0
    %v1284 = vadd.f32 0.0, %v1283
    %v1285 = vpop.f32.mrf.mxu0
    %v1286 = vadd.f32 0.0, %v1285
    %v1287 = vpop.f32.mrf.mxu0
    %v1288 = vadd.f32 0.0, %v1287
    %1289 = vdwg.mxu0
    %1290 = vmatprep.subr.bf16.mxu0 %v1202
    %1291 = vmatpush1.bf16.msra.mxu0 %v1201
    %1292 = vmatprep.subr.bf16.mxu0 %v1198
    %1293 = vmatpush1.bf16.msra.mxu0 %v1197
    %1294 = vmatprep.subr.bf16.mxu0 %v1194
    %1295 = vmatpush1.bf16.msra.mxu0 %v1193
    %1296 = vmatprep.subr.bf16.mxu0 %v1190
    %1297 = vmatpush1.bf16.msra.mxu0 %v1189
    %1298 = vmatprep.subr.bf16.mxu0 %v1186
    %1299 = vmatpush1.bf16.msra.mxu0 %v1185
    %1300 = vmatprep.subr.bf16.mxu0 %v1182
    %1301 = vmatpush1.bf16.msra.mxu0 %v1181
    %1302 = vmatprep.subr.bf16.mxu0 %v1178
    %1303 = vmatpush1.bf16.msra.mxu0 %v1177
    %1304 = vmatprep.subr.bf16.mxu0 %v1174
    %1305 = vmatpush1.bf16.msra.mxu0 %v1173
    %1306 = vmatprep.subr.bf16.mxu0 0
    %1307 = vmatpush2.bf16.msra.mxu0 0
    %1308 = vmatprep.subr.bf16.mxu0 0
    %1309 = vmatpush2.bf16.msra.mxu0 0
    %1310 = vmatprep.subr.bf16.mxu0 0
    %1311 = vmatpush2.bf16.msra.mxu0 0
    %1312 = vmatprep.subr.bf16.mxu0 0
    %1313 = vmatpush2.bf16.msra.mxu0 0
    %1314 = vmatprep.subr.bf16.mxu0 0
    %1315 = vmatpush2.bf16.msra.mxu0 0
    %1316 = vmatprep.subr.bf16.mxu0 0
    %1317 = vmatpush2.bf16.msra.mxu0 0
    %1318 = vmatprep.subr.bf16.mxu0 0
    %1319 = vmatpush2.bf16.msra.mxu0 0
    %1320 = vmatprep.subr.bf16.mxu0 %v1206
    %1321 = vmatpush2.bf16.msra.mxu0 %v1205
    %1322 = vmatprep.mubr.bf16.mxu0 %v1245
    %1323 = vmatmul.mubr.bf16.gmra.mxu0 %v1060
    %v1324 = vpop.f32.mrf.mxu0
    %v1325 = vadd.f32 0.0, %v1324
    %v1326 = vpop.f32.mrf.mxu0
    %v1327 = vadd.f32 0.0, %v1326
    %v1328 = vpop.f32.mrf.mxu0
    %v1329 = vadd.f32 0.0, %v1328
    %v1330 = vpop.f32.mrf.mxu0
    %v1331 = vadd.f32 0.0, %v1330
    %1332 = vdwg.mxu0
    %v1333 = vld [vmem:[%s6] sm:$0xff]
    %v1334 = vld [vmem:[%s6 + $0x8] sm:$0xff]
    %v1335 = vld [vmem:[%s7] sm:$0xff]
    %v1336 = vld [vmem:[%s7 + $0x8] sm:$0xff]
    %v1337 = vadd.f32 %v1282, %v1284
    %v1338 = vadd.f32 %v1337, %v1325
    %v1339 = vadd.f32 %v1338, %v1327
    %1340 = vadd.xlane.f32.xlu0 %v1339
    %v1341 = vpop.xlane.xlu0 %1340
    %v1342 = vadd.f32 %v1286, %v1288
    %v1343 = vadd.f32 %v1342, %v1329
    %v1344 = vadd.f32 %v1343, %v1331
    %1345 = vadd.xlane.f32.xlu0 %v1344
    %v1346 = vpop.xlane.xlu0 %1345
    %v1347 = vmul.f32 %v1341, 0.001953125
    %v1348 = vmul.f32 %v1346, 0.001953125
    %v1349 = vmul.f32 %v1282, %v1282
    %v1350 = vmul.f32 %v1284, %v1284
    %v1351 = vmul.f32 %v1325, %v1325
    %v1352 = vmul.f32 %v1327, %v1327
    %v1353 = vmul.f32 %v1286, %v1286
    %v1354 = vmul.f32 %v1288, %v1288
    %v1355 = vmul.f32 %v1329, %v1329
    %v1356 = vmul.f32 %v1331, %v1331
    %v1357 = vadd.f32 %v1349, %v1350
    %v1358 = vadd.f32 %v1357, %v1351
    %v1359 = vadd.f32 %v1358, %v1352
    %1360 = vadd.xlane.f32.xlu0 %v1359
    %v1361 = vpop.xlane.xlu0 %1360
    %v1362 = vadd.f32 %v1353, %v1354
    %v1363 = vadd.f32 %v1362, %v1355
    %v1364 = vadd.f32 %v1363, %v1356
    %1365 = vadd.xlane.f32.xlu0 %v1364
    %v1366 = vpop.xlane.xlu0 %1365
    %v1367 = vmul.f32 %v1361, 0.001953125
    %v1368 = vmul.f32 %v1366, 0.001953125
    %v1369 = vmul.f32 %v1347, %v1347
    %v1370 = vmul.f32 %v1348, %v1348
    %v1371 = vsub.f32 %v1367, %v1369
    %v1372 = vsub.f32 %v1368, %v1370
    %v1373 = vadd.f32 %v1371, 1e-05
    %v1374 = vadd.f32 %v1372, 1e-05
    %v1375 = vrsqrt.pop %v1373
    %v1376 = vrsqrt.pop %v1374
    %v1377 = vmul.f32 %v1333, %v1375
    %v1378 = vmul.f32 %v1334, %v1376
    %v1379 = vmul.f32 %v1347, %v1377
    %v1380 = vmul.f32 %v1348, %v1378
    %v1381 = vsub.f32 %v1335, %v1379
    %v1382 = vsub.f32 %v1336, %v1380
    %1384 = vset.pattern.permute.xlu0 0
    %1385 = vperm.xlu0 %1384, %v1377
    %v1386 = vpop.permute.xlu0 %1385
    %1389 = vset.pattern.permute.xlu0 0
    %1390 = vperm.xlu0 %1389, %v1378
    %v1391 = vpop.permute.xlu0 %1390
    %v1393 = vmul.f32 %v1282, %v1386
    %v1394 = vmul.f32 %v1284, %v1386
    %v1395 = vmul.f32 %v1325, %v1386
    %v1396 = vmul.f32 %v1327, %v1386
    %v1397 = vmul.f32 %v1286, %v1391
    %v1398 = vmul.f32 %v1288, %v1391
    %v1399 = vmul.f32 %v1329, %v1391
    %v1400 = vmul.f32 %v1331, %v1391
    %1402 = vset.pattern.permute.xlu0 0
    %1403 = vperm.xlu0 %1402, %v1381
    %v1404 = vpop.permute.xlu0 %1403
    %1407 = vset.pattern.permute.xlu0 0
    %1408 = vperm.xlu0 %1407, %v1382
    %v1409 = vpop.permute.xlu0 %1408
    %v1411 = vadd.f32 %v1393, %v1404
    %v1412 = vadd.f32 %v1394, %v1404
    %v1413 = vadd.f32 %v1395, %v1404
    %v1414 = vadd.f32 %v1396, %v1404
    %v1415 = vadd.f32 %v1397, %v1409
    %v1416 = vadd.f32 %v1398, %v1409
    %v1417 = vadd.f32 %v1399, %v1409
    %v1418 = vadd.f32 %v1400, %v1409
    %v1419 = vmax.f32 %v1411, 0.0
    %v1420 = vmax.f32 %v1412, 0.0
    %v1421 = vmax.f32 %v1413, 0.0
    %v1422 = vmax.f32 %v1414, 0.0
    %v1423 = vmax.f32 %v1415, 0.0
    %v1424 = vmax.f32 %v1416, 0.0
    %v1425 = vmax.f32 %v1417, 0.0
    %v1426 = vmax.f32 %v1418, 0.0
    %v1427 = vld [vmem:[%s8] sm:$0xf]
    %v1428 = vpack.c.bf16 %v1423, %v1419
    %v1429 = vpack.c.bf16 %v1424, %v1420
    %v1430 = vpack.c.bf16 %v1425, %v1421
    %v1431 = vpack.c.bf16 %v1426, %v1422
    %v1433 = vsel %vm1243, %v1427, 0
    %1435 = vmatprep.subr.bf16.mxu0 0
    %1436 = vmatpush1.bf16.msra.mxu0 0
    %1437 = vmatprep.subr.bf16.mxu0 0
    %1438 = vmatpush1.bf16.msra.mxu0 0
    %1439 = vmatprep.subr.bf16.mxu0 0
    %1440 = vmatpush1.bf16.msra.mxu0 0
    %1441 = vmatprep.subr.bf16.mxu0 0
    %1442 = vmatpush1.bf16.msra.mxu0 0
    %1443 = vmatprep.subr.bf16.mxu0 0
    %1444 = vmatpush1.bf16.msra.mxu0 0
    %1445 = vmatprep.subr.bf16.mxu0 0
    %1446 = vmatpush1.bf16.msra.mxu0 0
    %1447 = vmatprep.subr.bf16.mxu0 0
    %1448 = vmatpush1.bf16.msra.mxu0 0
    %1449 = vmatprep.subr.bf16.mxu0 %v1429
    %1450 = vmatpush1.bf16.msra.mxu0 %v1428
    %1451 = vmatprep.subr.bf16.mxu0 0
    %1452 = vmatpush2.bf16.msra.mxu0 0
    %1453 = vmatprep.subr.bf16.mxu0 0
    %1454 = vmatpush2.bf16.msra.mxu0 0
    %1455 = vmatprep.subr.bf16.mxu0 0
    %1456 = vmatpush2.bf16.msra.mxu0 0
    %1457 = vmatprep.subr.bf16.mxu0 0
    %1458 = vmatpush2.bf16.msra.mxu0 0
    %1459 = vmatprep.subr.bf16.mxu0 0
    %1460 = vmatpush2.bf16.msra.mxu0 0
    %1461 = vmatprep.subr.bf16.mxu0 0
    %1462 = vmatpush2.bf16.msra.mxu0 0
    %1463 = vmatprep.subr.bf16.mxu0 0
    %1464 = vmatpush2.bf16.msra.mxu0 0
    %1465 = vmatprep.subr.bf16.mxu0 0
    %1466 = vmatpush2.bf16.msra.mxu0 0
    %1467 = vmatprep.mubr.bf16.mxu0 0
    %1468 = vmatmul.mubr.bf16.gmra.mxu0 %v1433
    %v1469 = vpop.f32.mrf.mxu0
    %v1470 = vadd.f32 0.0, %v1469
    %v1471 = vpop.f32.mrf.mxu0
    %v1472 = vadd.f32 0.0, %v1471
    %v1473 = vpop.f32.mrf.mxu0
    %v1474 = vpop.f32.mrf.mxu0
    %1475 = vdwg.mxu0
    %1476 = vmatprep.subr.bf16.mxu0 0
    %1477 = vmatpush1.bf16.msra.mxu0 0
    %1478 = vmatprep.subr.bf16.mxu0 0
    %1479 = vmatpush1.bf16.msra.mxu0 0
    %1480 = vmatprep.subr.bf16.mxu0 0
    %1481 = vmatpush1.bf16.msra.mxu0 0
    %1482 = vmatprep.subr.bf16.mxu0 0
    %1483 = vmatpush1.bf16.msra.mxu0 0
    %1484 = vmatprep.subr.bf16.mxu0 0
    %1485 = vmatpush1.bf16.msra.mxu0 0
    %1486 = vmatprep.subr.bf16.mxu0 0
    %1487 = vmatpush1.bf16.msra.mxu0 0
    %1488 = vmatprep.subr.bf16.mxu0 0
    %1489 = vmatpush1.bf16.msra.mxu0 0
    %1490 = vmatprep.subr.bf16.mxu0 %v1431
    %1491 = vmatpush1.bf16.msra.mxu0 %v1430
    %1492 = vmatprep.subr.bf16.mxu0 0
    %1493 = vmatpush2.bf16.msra.mxu0 0
    %1494 = vmatprep.subr.bf16.mxu0 0
    %1495 = vmatpush2.bf16.msra.mxu0 0
    %1496 = vmatprep.subr.bf16.mxu0 0
    %1497 = vmatpush2.bf16.msra.mxu0 0
    %1498 = vmatprep.subr.bf16.mxu0 0
    %1499 = vmatpush2.bf16.msra.mxu0 0
    %1500 = vmatprep.subr.bf16.mxu0 0
    %1501 = vmatpush2.bf16.msra.mxu0 0
    %1502 = vmatprep.subr.bf16.mxu0 0
    %1503 = vmatpush2.bf16.msra.mxu0 0
    %1504 = vmatprep.subr.bf16.mxu0 0
    %1505 = vmatpush2.bf16.msra.mxu0 0
    %1506 = vmatprep.subr.bf16.mxu0 0
    %1507 = vmatpush2.bf16.msra.mxu0 0
    %1508 = vmatprep.mubr.bf16.mxu0 0
    %1509 = vmatmul.mubr.bf16.gmra.mxu0 %v1433
    %v1510 = vpop.f32.mrf.mxu0
    %v1511 = vadd.f32 0.0, %v1510
    %v1512 = vpop.f32.mrf.mxu0
    %v1513 = vadd.f32 0.0, %v1512
    %v1514 = vpop.f32.mrf.mxu0
    %v1515 = vpop.f32.mrf.mxu0
    %1516 = vdwg.mxu0
    %v1517 = vld [vmem:[%s9] sm:$0xff]
    %v1518 = vld [vmem:[%s10] sm:$0xff]
    %v1519 = vadd.f32 %v1470, %v1472
    %v1520 = vadd.f32 %v1519, %v1511
    %v1521 = vadd.f32 %v1520, %v1513
    %1522 = vadd.xlane.f32.xlu0 %v1521
    %v1523 = vpop.xlane.xlu0 %1522
    %v1524 = vmul.f32 %v1523, 0.001953125
    %v1525 = vmul.f32 %v1470, %v1470
    %v1526 = vmul.f32 %v1472, %v1472
    %v1527 = vmul.f32 %v1511, %v1511
    %v1528 = vmul.f32 %v1513, %v1513
    %v1529 = vadd.f32 %v1525, %v1526
    %v1530 = vadd.f32 %v1529, %v1527
    %v1531 = vadd.f32 %v1530, %v1528
    %1532 = vadd.xlane.f32.xlu0 %v1531
    %v1533 = vpop.xlane.xlu0 %1532
    %v1534 = vmul.f32 %v1533, 0.001953125
    %v1535 = vmul.f32 %v1524, %v1524
    %v1536 = vsub.f32 %v1534, %v1535
    %v1537 = vadd.f32 %v1536, 1e-05
    %v1538 = vrsqrt.pop %v1537
    %v1539 = vmul.f32 %v1517, %v1538
    %v1540 = vmul.f32 %v1524, %v1539
    %v1541 = vsub.f32 %v1518, %v1540
    %1543 = vset.pattern.permute.xlu0 0
    %1544 = vperm.xlu0 %1543, %v1539
    %v1545 = vpop.permute.xlu0 %1544
    %v1547 = vmul.f32 %v1470, %v1545
    %v1548 = vmul.f32 %v1472, %v1545
    %v1549 = vmul.f32 %v1511, %v1545
    %v1550 = vmul.f32 %v1513, %v1545
    %1552 = vset.pattern.permute.xlu0 0
    %1553 = vperm.xlu0 %1552, %v1541
    %v1554 = vpop.permute.xlu0 %1553
    %v1556 = vadd.f32 %v1547, %v1554
    %v1557 = vadd.f32 %v1548, %v1554
    %v1558 = vadd.f32 %v1549, %v1554
    %v1559 = vadd.f32 %v1550, %v1554
    %v1560 = vadd.f32 %v1556, %v150
    %v1561 = vadd.f32 %v1557, %v151
    %v1562 = vadd.f32 %v1558, %v152
    %v1563 = vadd.f32 %v1559, %v153
    %v1564 = vmax.f32 %v1560, 0.0
    %v1565 = vmax.f32 %v1561, 0.0
    %v1566 = vmax.f32 %v1562, 0.0
    %v1567 = vmax.f32 %v1563, 0.0
    %1568 = vst [vmem:[#allocation3] sm:$0xff] %v1564
    %1569 = vst [vmem:[#allocation3 + $0x8] sm:$0xff] %v1565
    %1570 = vst [vmem:[#allocation3 + $0x10] sm:$0xff] %v1566
    %1571 = vst [vmem:[#allocation3 + $0x18] sm:$0xff] %v1567
    // Predicated region
    $region114: #{tpu_custom_call.1} parent=1 // pred_check
      _
    $region115: #{tpu_custom_call.1} parent=1 // pred_check_branch
      %1573 = sbr.rel target = $region117
    $region116: #{tpu_custom_call.1} parent=1 // pred_region
      %1574 = sst [smem:[#allocation13]] [#allocation12]
      %1575 = sst [smem:[#allocation14]] [#allocation11]
    $region117: #{tpu_custom_call.1} parent=1 // pred_fallthru
      _
    %1577 = shalt.err (0)
    %s1579 = sshll.u32 [#allocation3], 4
    %s1580 = int_to_ptr.vmem [resolvable:$true] %s1579
    %1582 = dma.vmem_to_hbm [thread:$0]  %s1580, 256, %s11, [#allocation6]
    %s1583 = scalar_lea.vmem [#allocation3], 16
    %s1584 = scalar_lea.hbm %s11, 256
    %s1585 = scalar_lea.sflag [#allocation6], 1
    // Predicated region
    $region118: #{tpu_custom_call.1} parent=1 // pred_check
      _
    $region119: #{tpu_custom_call.1} parent=1 // pred_check_branch
      %1587 = sbr.rel target = $region121
    $region120: #{tpu_custom_call.1} parent=1 // pred_region
      %1588 = sst [smem:[#allocation13]] [#allocation16]
      %1589 = sst [smem:[#allocation14]] [#allocation15]
    $region121: #{tpu_custom_call.1} parent=1 // pred_fallthru
      _
    %1591 = shalt.err (0)
    %s1593 = sshll.u32 %s1583, 4
    %s1594 = int_to_ptr.vmem [resolvable:$true] %s1593
    %1596 = dma.vmem_to_hbm [thread:$0]  %s1594, 256, %s1584, %s1585
    %s1597 = sshll.u32 %s145, 4
    %1598 = dma.done [#allocation6], %s1597
    %s1599 = sshll.u32 %s145, 4
    %1600 = dma.done %s1585, %s1599
    %1601 = vsyncpa [#allocation8], 1
  %1602 = vsyncmov [#allocation5]
  %s1603 = vpop.sfrf %1602
  %p1604 = scmp.eq.s32.totalorder %s1603, 0
  %p1605 = pneg %p1604
  %1607 = shalt.err (%p1605)
  %s1608 = scalar_lea.sflag [#allocation5], 1
  %1609 = vsyncmov %s1608
  %s1610 = vpop.sfrf %1609
  %p1611 = scmp.eq.s32.totalorder %s1610, 0
  %p1612 = pneg %p1611
  %1614 = shalt.err (%p1612)
  %1615 = vsyncmov [#allocation6]
  %s1616 = vpop.sfrf %1615
  %p1617 = scmp.eq.s32.totalorder %s1616, 0
  %p1618 = pneg %p1617
  %1620 = shalt.err (%p1618)
  %s1621 = scalar_lea.sflag [#allocation6], 1
  %1622 = vsyncmov %s1621
  %s1623 = vpop.sfrf %1622
  %p1624 = scmp.eq.s32.totalorder %s1623, 0
  %p1625 = pneg %p1624
  %1627 = shalt.err (%p1625)

</llo_original>
